<compile_context>
chip_gen: v7x
topology: tpu7x:2x2x1
jax: 0.10.0
libtpu: 0.0.40
codegen_flags: <defaults>
</compile_context>

<pallas_src>
import functools

import jax
import jax.numpy as jnp
from jax.experimental import pallas as pl
from jax.experimental.pallas import tpu as pltpu

INPUT_SIZE = 16
HIDDEN_SIZE = 32
CONDITION_SIZE = 8
NUM_SPEAKERS = 4
NUM_LAYERS = 3
NUM_STEPS = 10
LN_EPS = 1e-5

PACK = 8                                   # batch rows packed per vector row
X_LANES = PACK * INPUT_SIZE                # 128
H_LANES = PACK * HIDDEN_SIZE               # 256
C_LANES = PACK * CONDITION_SIZE            # 64
IDX_LANES = 2 * PACK                       # 16  (t_0..t_7, s_0..s_7)
N_SPK = NUM_SPEAKERS + 1
OH_RAW = PACK * (NUM_STEPS + N_SPK)        # 120 used one-hot slots
OH_LANES = 128                             # padded to a full 128-lane vreg


def cond_diffusion_kernel(xp_ref, cp_ref, idx_ref,
                          w1_ref, b1_ref, wc_ref, bc_ref,
                          e_ref, pat_ref, tab_ref,
                          wl_ref, bl_ref, lng_ref, lnb_ref,
                          gn_ref, w2_ref, b2_ref, out_ref):
    f32 = jnp.float32
    bf16 = jnp.bfloat16

    # ---- entry: relu(fc1(x)) + relu(condition_layer(c)) + step_emb + spk_emb
    # inputs already bf16 -> pure bf16 MXU work, f32 accumulation
    hx = jnp.dot(xp_ref[...], w1_ref[...], preferred_element_type=f32) + b1_ref[...]
    hc = jnp.dot(cp_ref[...], wc_ref[...], preferred_element_type=f32) + bc_ref[...]

    # Embedding gathers as one one-hot matmul on the MXU.  idx holds the 8
    # packed step indices then the 8 packed speaker indices per row; `e`
    # broadcasts each index across its one-hot slot, `pat` holds the slot
    # positions (all small exact integers, exact in bf16/f32).  Padded slots
    # 120..127 carry pat = -1 and zero table rows, so they never contribute.
    slots = jnp.dot(idx_ref[...], e_ref[...], preferred_element_type=f32)   # (R,128)
    onehot = (slots == pat_ref[...]).astype(bf16)
    emb = jnp.dot(onehot, tab_ref[...], preferred_element_type=f32)         # (R,256)

    h = jax.nn.relu(hx) + jax.nn.relu(hc) + emb

    gn = gn_ref[...]                       # (256,256) bf16 segmented-mean matrix

    def normalize(z):
        # centered two-pass stats over each packed sub-row's 32 lanes;
        # both reductions run as bf16 MXU matmuls with f32 accumulation.
        mean = jnp.dot(z.astype(bf16), gn, preferred_element_type=f32)
        zc = z - mean
        var = jnp.dot((zc * zc).astype(bf16), gn, preferred_element_type=f32)
        inv = jax.lax.rsqrt(var + LN_EPS)
        return zc * inv

    # residual stack: hidden = hidden + relu(LN_i(layer_i(hidden)))
    for i in range(NUM_LAYERS):
        z = jnp.dot(h.astype(bf16), wl_ref[i], preferred_element_type=f32) + bl_ref[i]
        z = normalize(z) * lng_ref[i] + lnb_ref[i]
        h = h + jax.nn.relu(z)

    # output = fc2(LN_last(hidden)); LN_last's gamma/beta are folded into w2/b2
    z = normalize(h)
    out_ref[...] = (jnp.dot(z.astype(bf16), w2_ref[...],
                            preferred_element_type=f32) + b2_ref[...])


def init_params(key):
    def lin(k, din, dout):
        # PyTorch nn.Linear default init: U(-1/sqrt(in), 1/sqrt(in))
        bound = 1.0 / float(din) ** 0.5
        kw, kb = jax.random.split(k)
        w = jax.random.uniform(kw, (din, dout), jnp.float32, -bound, bound)
        b = jax.random.uniform(kb, (1, dout), jnp.float32, -bound, bound)
        return w, b

    ks = jax.random.split(key, 8 + NUM_LAYERS)
    p = {}
    p["w1"], p["b1"] = lin(ks[0], INPUT_SIZE, HIDDEN_SIZE)
    p["wc"], p["bc"] = lin(ks[1], CONDITION_SIZE, HIDDEN_SIZE)
    p["w2"], p["b2"] = lin(ks[2], HIDDEN_SIZE, INPUT_SIZE)
    p["step_w"], p["step_b"] = lin(ks[3], HIDDEN_SIZE, HIDDEN_SIZE)
    p["speaker_emb_table"] = jax.random.normal(
        ks[4], (N_SPK, HIDDEN_SIZE), jnp.float32)
    p["step_emb_table"] = jax.random.normal(
        ks[5], (NUM_STEPS, HIDDEN_SIZE), jnp.float32)
    wl, bl = [], []
    for i in range(NUM_LAYERS):
        w, b = lin(ks[6 + i], HIDDEN_SIZE, HIDDEN_SIZE)
        wl.append(w)
        bl.append(b[0])
    p["wl"] = jnp.stack(wl)                                   # (L, H, H)
    p["bl"] = jnp.stack(bl)                                   # (L, H)
    p["ln_g"] = jnp.ones((NUM_LAYERS + 1, HIDDEN_SIZE), jnp.float32)
    p["ln_b"] = jnp.zeros((NUM_LAYERS + 1, HIDDEN_SIZE), jnp.float32)
    return p


def pack_params(p):
    """Pre-pack all weights 8-way block-diagonally (done once, outside the kernel)."""
    f32, bf16 = jnp.float32, jnp.bfloat16
    eye = jnp.eye(PACK, dtype=f32)

    def bd(w):                       # 8-way block-diagonal packing
        return jnp.kron(eye, w.astype(f32))

    def tile_b(b):                   # per-sub-row bias / LN params
        return jnp.tile(b.astype(f32), (1, PACK))

    # fold the final LayerNorm's gamma/beta into fc2:  out = LNnorm(h)@w2' + b2'
    g_last = p["ln_g"][NUM_LAYERS]                             # (32,)
    b_last = p["ln_b"][NUM_LAYERS]                             # (32,)
    w2_eff = p["w2"] * g_last[:, None]                         # (32, 16)
    b2_eff = (p["b2"][0] + b_last @ p["w2"])[None, :]          # (1, 16)

    packed = {
        "w1": bd(p["w1"]).astype(bf16),                        # (128, 256)
        "b1": tile_b(p["b1"]),                                 # (1, 256)
        "wc": bd(p["wc"]).astype(bf16),                        # (64, 256)
        "bc": tile_b(p["bc"]),                                 # (1, 256)
        "wl": jnp.stack([bd(p["wl"][i])
                         for i in range(NUM_LAYERS)]).astype(bf16),  # (3,256,256)
        "bl": tile_b(p["bl"]),                                 # (3, 256)
        "ln_g": tile_b(p["ln_g"][:NUM_LAYERS]),                # (3, 256)
        "ln_b": tile_b(p["ln_b"][:NUM_LAYERS]),                # (3, 256)
        "w2": bd(w2_eff).astype(bf16),                         # (256, 128)
        "b2": tile_b(b2_eff),                                  # (1, 128)
    }

    # Step Linear+ReLU folded into the step table (row-select commutes with relu).
    step_ht = jax.nn.relu(p["step_emb_table"] @ p["step_w"] + p["step_b"])  # (10,32)
    tab = jnp.concatenate([bd(step_ht), bd(p["speaker_emb_table"])], axis=0)  # (120,256)
    tab = jnp.pad(tab, ((0, OH_LANES - OH_RAW), (0, 0)))       # pad to 128 rows
    packed["tab"] = tab.astype(bf16)                           # (128, 256)

    # index -> slot expansion matrix and slot pattern for the one-hot compare,
    # padded from 120 -> 128 lanes (padded slots never match: pat = -1, tab = 0)
    e_t = jnp.concatenate([jnp.kron(eye, jnp.ones((1, NUM_STEPS), f32)),
                           jnp.zeros((PACK, PACK * N_SPK), f32)], axis=1)
    e_s = jnp.concatenate([jnp.zeros((PACK, PACK * NUM_STEPS), f32),
                           jnp.kron(eye, jnp.ones((1, N_SPK), f32))], axis=1)
    e = jnp.concatenate([e_t, e_s], axis=0)                    # (16, 120)
    e = jnp.pad(e, ((0, 0), (0, OH_LANES - OH_RAW)))
    packed["e"] = e.astype(bf16)                               # (16, 128)
    packed["pat"] = jnp.concatenate(
        [jnp.tile(jnp.arange(NUM_STEPS, dtype=f32), PACK),
         jnp.tile(jnp.arange(N_SPK, dtype=f32), PACK),
         jnp.full((OH_LANES - OH_RAW,), -1.0, f32)])[None, :]  # (1, 128)

    # segmented-mean matrix: averages each 32-lane group, broadcast back.
    # 1/32 = 2^-5 is exact in bf16.
    packed["gn"] = jnp.kron(eye, jnp.full((HIDDEN_SIZE, HIDDEN_SIZE),
                                          1.0 / HIDDEN_SIZE, f32)).astype(bf16)  # (256,256)
    return packed


def _round_up(n, m):
    return (n + m - 1) // m * m


@functools.partial(jax.jit, static_argnames=("tb_max",))
def conditional_diffusion_forward(x, condition, speaker, t, packed, tb_max=4096):
    B = x.shape[0]
    # batch tile: multiple of 128 rows (=> 16 packed bf16 sub-rows), and sized
    # so large batches give >= 2 grid steps (both v7x TensorCores busy).
    tb = min(tb_max, _round_up((B + 1) // 2, 128))
    tb = max(tb, 128)
    bp = _round_up(B, tb)
    rb = tb // PACK                 # packed rows per grid step
    rows = bp // PACK               # total packed rows
    pad = bp - B

    bf16 = jnp.bfloat16
    xf = jnp.pad(x.astype(jnp.float32), ((0, pad), (0, 0))).astype(bf16)
    cf = jnp.pad(condition.astype(jnp.float32), ((0, pad), (0, 0))).astype(bf16)
    tf_ = jnp.pad(t.astype(jnp.int32).reshape(B), ((0, pad),))
    sf = jnp.pad(speaker.astype(jnp.int32).reshape(B), ((0, pad),))

    # lane-dense packed views (free row-major reshapes, done outside the kernel)
    xp = xf.reshape(rows, X_LANES)                                  # (rows, 128) bf16
    cp = cf.reshape(rows, C_LANES)                                  # (rows, 64)  bf16
    idx = jnp.concatenate([tf_.reshape(rows, PACK),
                           sf.reshape(rows, PACK)], axis=1).astype(bf16)  # (rows,16)

    def row_spec(lanes):
        return pl.BlockSpec((rb, lanes), lambda i: (i, 0))

    def const_spec(a):
        if a.ndim == 3:
            return pl.BlockSpec(a.shape, lambda i: (0, 0, 0))
        return pl.BlockSpec(a.shape, lambda i: (0, 0))

    out_p = pl.pallas_call(
        cond_diffusion_kernel,
        out_shape=jax.ShapeDtypeStruct((rows, X_LANES), jnp.float32),
        grid=(rows // rb,),
        in_specs=[
            row_spec(X_LANES), row_spec(C_LANES), row_spec(IDX_LANES),
            const_spec(packed["w1"]), const_spec(packed["b1"]),
            const_spec(packed["wc"]), const_spec(packed["bc"]),
            const_spec(packed["e"]), const_spec(packed["pat"]),
            const_spec(packed["tab"]),
            const_spec(packed["wl"]), const_spec(packed["bl"]),
            const_spec(packed["ln_g"]), const_spec(packed["ln_b"]),
            const_spec(packed["gn"]), const_spec(packed["w2"]),
            const_spec(packed["b2"]),
        ],
        out_specs=row_spec(X_LANES),
        compiler_params=pltpu.CompilerParams(
            dimension_semantics=("parallel",),
            vmem_limit_bytes=32 * 1024 * 1024,
        ),
    )(xp, cp, idx,
      packed["w1"], packed["b1"], packed["wc"], packed["bc"],
      packed["e"], packed["pat"], packed["tab"],
      packed["wl"], packed["bl"], packed["ln_g"], packed["ln_b"],
      packed["gn"], packed["w2"], packed["b2"])

    return out_p.reshape(bp, INPUT_SIZE)[:B]


def reference_forward(x, condition, speaker, t, p):
    """Pure-JAX f32 reference of the PyTorch eval-mode forward."""
    relu = jax.nn.relu

    def ln(z, g, b):
        m = z.mean(-1, keepdims=True)
        v = ((z - m) ** 2).mean(-1, keepdims=True)
        return (z - m) / jnp.sqrt(v + LN_EPS) * g + b

    h = relu(x @ p["w1"] + p["b1"])
    step_ht = relu(p["step_emb_table"] @ p["step_w"] + p["step_b"])
    h = h + step_ht[t.reshape(-1)]
    h = h + relu(condition @ p["wc"] + p["bc"])
    h = h + p["speaker_emb_table"][speaker]
    for i in range(NUM_LAYERS):
        z = h @ p["wl"][i] + p["bl"][i]
        h = h + relu(ln(z, p["ln_g"][i], p["ln_b"][i]))
    z = ln(h, p["ln_g"][NUM_LAYERS], p["ln_b"][NUM_LAYERS])
    return z @ p["w2"] + p["b2"]


if __name__ == "__main__":
    key = jax.random.PRNGKey(0)
    pkey, xkey, ckey, skey, tkey = jax.random.split(key, 5)

    params = init_params(pkey)
    packed = pack_params(params)

    B = 2
    x = jax.random.normal(xkey, (B, INPUT_SIZE), jnp.float32)
    condition = jax.random.normal(ckey, (B, CONDITION_SIZE), jnp.float32)
    speaker = jax.random.randint(skey, (B,), 0, NUM_SPEAKERS)
    t = jax.random.randint(tkey, (B, 1), 0, NUM_STEPS)

    out = conditional_diffusion_forward(x, condition, speaker, t, packed)
    out = jax.block_until_ready(out)
    assert out.shape == (B, INPUT_SIZE) and out.dtype == jnp.float32
    assert bool(jnp.all(jnp.isfinite(out)))

    ref = reference_forward(x, condition, speaker, t, params)
    err = float(jnp.max(jnp.abs(out - ref)))
    assert err < 1e-1, f"max abs error vs f32 reference too large: {err}"

    print("KERNEL_OK")
</pallas_src>

<mosaic_0001>
module attributes {stable_mosaic.version = 11 : i64} {
  func.func @cond_diffusion_kernel(%arg0: i32, %arg1: memref<16x128xbf16, #tpu.memory_space<vmem>>, %arg2: memref<16x64xbf16, #tpu.memory_space<vmem>>, %arg3: memref<16x16xbf16, #tpu.memory_space<vmem>>, %arg4: memref<128x256xbf16, #tpu.memory_space<vmem>>, %arg5: memref<1x256xf32, #tpu.memory_space<vmem>>, %arg6: memref<64x256xbf16, #tpu.memory_space<vmem>>, %arg7: memref<1x256xf32, #tpu.memory_space<vmem>>, %arg8: memref<16x128xbf16, #tpu.memory_space<vmem>>, %arg9: memref<1x128xf32, #tpu.memory_space<vmem>>, %arg10: memref<128x256xbf16, #tpu.memory_space<vmem>>, %arg11: memref<3x256x256xbf16, #tpu.memory_space<vmem>>, %arg12: memref<3x256xf32, #tpu.memory_space<vmem>>, %arg13: memref<3x256xf32, #tpu.memory_space<vmem>>, %arg14: memref<3x256xf32, #tpu.memory_space<vmem>>, %arg15: memref<256x256xbf16, #tpu.memory_space<vmem>>, %arg16: memref<256x128xbf16, #tpu.memory_space<vmem>>, %arg17: memref<1x128xf32, #tpu.memory_space<vmem>>, %arg18: memref<16x128xf32, #tpu.memory_space<vmem>>) attributes {dimension_semantics = [#tpu.dimension_semantics<parallel>], iteration_bounds = array<i64: 1>, scalar_prefetch = 0 : i64, scratch_operands = 0 : i64, tpu.core_type = #tpu.core_type<tc>, window_params = [{transform_indices = @transform_0, window_bounds = array<i64: 16, 128>}, {transform_indices = @transform_1, window_bounds = array<i64: 16, 64>}, {transform_indices = @transform_2, window_bounds = array<i64: 16, 16>}, {pipeline_mode = #tpu.pipeline_mode<synchronous>, transform_indices = @transform_3, window_bounds = array<i64: 128, 256>}, {pipeline_mode = #tpu.pipeline_mode<synchronous>, transform_indices = @transform_4, window_bounds = array<i64: 1, 256>}, {pipeline_mode = #tpu.pipeline_mode<synchronous>, transform_indices = @transform_5, window_bounds = array<i64: 64, 256>}, {pipeline_mode = #tpu.pipeline_mode<synchronous>, transform_indices = @transform_6, window_bounds = array<i64: 1, 256>}, {pipeline_mode = #tpu.pipeline_mode<synchronous>, transform_indices = @transform_7, window_bounds = array<i64: 16, 128>}, {pipeline_mode = #tpu.pipeline_mode<synchronous>, transform_indices = @transform_8, window_bounds = array<i64: 1, 128>}, {pipeline_mode = #tpu.pipeline_mode<synchronous>, transform_indices = @transform_9, window_bounds = array<i64: 128, 256>}, {pipeline_mode = #tpu.pipeline_mode<synchronous>, transform_indices = @transform_10, window_bounds = array<i64: 3, 256, 256>}, {pipeline_mode = #tpu.pipeline_mode<synchronous>, transform_indices = @transform_11, window_bounds = array<i64: 3, 256>}, {pipeline_mode = #tpu.pipeline_mode<synchronous>, transform_indices = @transform_12, window_bounds = array<i64: 3, 256>}, {pipeline_mode = #tpu.pipeline_mode<synchronous>, transform_indices = @transform_13, window_bounds = array<i64: 3, 256>}, {pipeline_mode = #tpu.pipeline_mode<synchronous>, transform_indices = @transform_14, window_bounds = array<i64: 256, 256>}, {pipeline_mode = #tpu.pipeline_mode<synchronous>, transform_indices = @transform_15, window_bounds = array<i64: 256, 128>}, {pipeline_mode = #tpu.pipeline_mode<synchronous>, transform_indices = @transform_16, window_bounds = array<i64: 1, 128>}, {transform_indices = @transform_17, window_bounds = array<i64: 16, 128>}]} {
    %c0 = arith.constant 0 : index
    %c0_0 = arith.constant 0 : index
    %0 = vector.load %arg1[%c0, %c0_0] : memref<16x128xbf16, #tpu.memory_space<vmem>>, vector<16x128xbf16>
    %c0_1 = arith.constant 0 : index
    %c0_2 = arith.constant 0 : index
    %1 = vector.load %arg4[%c0_1, %c0_2] : memref<128x256xbf16, #tpu.memory_space<vmem>>, vector<128x256xbf16>
    %cst = arith.constant dense<0.000000e+00> : vector<16x256xf32>
    %2 = tpu.matmul %0, %1, %cst {dimension_numbers = #tpu.dot_dimension_numbers<[1], [0], [0], [1], [0, 0, 1, 1], [], []>} : vector<16x128xbf16>, vector<128x256xbf16>, vector<16x256xf32> -> vector<16x256xf32>
    %c0_3 = arith.constant 0 : index
    %c0_4 = arith.constant 0 : index
    %3 = vector.load %arg5[%c0_3, %c0_4] : memref<1x256xf32, #tpu.memory_space<vmem>>, vector<1x256xf32>
    %4 = vector.broadcast %3 : vector<1x256xf32> to vector<16x256xf32>
    %5 = arith.addf %2, %4 : vector<16x256xf32>
    %c0_5 = arith.constant 0 : index
    %c0_6 = arith.constant 0 : index
    %6 = vector.load %arg2[%c0_5, %c0_6] : memref<16x64xbf16, #tpu.memory_space<vmem>>, vector<16x64xbf16>
    %c0_7 = arith.constant 0 : index
    %c0_8 = arith.constant 0 : index
    %7 = vector.load %arg6[%c0_7, %c0_8] : memref<64x256xbf16, #tpu.memory_space<vmem>>, vector<64x256xbf16>
    %cst_9 = arith.constant dense<0.000000e+00> : vector<16x256xf32>
    %8 = tpu.matmul %6, %7, %cst_9 {dimension_numbers = #tpu.dot_dimension_numbers<[1], [0], [0], [1], [0, 0, 1, 1], [], []>} : vector<16x64xbf16>, vector<64x256xbf16>, vector<16x256xf32> -> vector<16x256xf32>
    %c0_10 = arith.constant 0 : index
    %c0_11 = arith.constant 0 : index
    %9 = vector.load %arg7[%c0_10, %c0_11] : memref<1x256xf32, #tpu.memory_space<vmem>>, vector<1x256xf32>
    %10 = vector.broadcast %9 : vector<1x256xf32> to vector<16x256xf32>
    %11 = arith.addf %8, %10 : vector<16x256xf32>
    %c0_12 = arith.constant 0 : index
    %c0_13 = arith.constant 0 : index
    %12 = vector.load %arg3[%c0_12, %c0_13] : memref<16x16xbf16, #tpu.memory_space<vmem>>, vector<16x16xbf16>
    %c0_14 = arith.constant 0 : index
    %c0_15 = arith.constant 0 : index
    %13 = vector.load %arg8[%c0_14, %c0_15] : memref<16x128xbf16, #tpu.memory_space<vmem>>, vector<16x128xbf16>
    %cst_16 = arith.constant dense<0.000000e+00> : vector<16x128xf32>
    %14 = tpu.matmul %12, %13, %cst_16 {dimension_numbers = #tpu.dot_dimension_numbers<[1], [0], [0], [1], [0, 0, 1, 1], [], []>} : vector<16x16xbf16>, vector<16x128xbf16>, vector<16x128xf32> -> vector<16x128xf32>
    %c0_17 = arith.constant 0 : index
    %c0_18 = arith.constant 0 : index
    %15 = vector.load %arg9[%c0_17, %c0_18] : memref<1x128xf32, #tpu.memory_space<vmem>>, vector<1x128xf32>
    %16 = vector.broadcast %15 : vector<1x128xf32> to vector<16x128xf32>
    %17 = arith.cmpf oeq, %14, %16 : vector<16x128xf32>
    %18 = arith.extui %17 : vector<16x128xi1> to vector<16x128xi32>
    %19 = arith.sitofp %18 : vector<16x128xi32> to vector<16x128xf32>
    %20 = arith.truncf %19 : vector<16x128xf32> to vector<16x128xbf16>
    %c0_19 = arith.constant 0 : index
    %c0_20 = arith.constant 0 : index
    %21 = vector.load %arg10[%c0_19, %c0_20] : memref<128x256xbf16, #tpu.memory_space<vmem>>, vector<128x256xbf16>
    %cst_21 = arith.constant dense<0.000000e+00> : vector<16x256xf32>
    %22 = tpu.matmul %20, %21, %cst_21 {dimension_numbers = #tpu.dot_dimension_numbers<[1], [0], [0], [1], [0, 0, 1, 1], [], []>} : vector<16x128xbf16>, vector<128x256xbf16>, vector<16x256xf32> -> vector<16x256xf32>
    %cst_22 = arith.constant 0.000000e+00 : f32
    %23 = vector.broadcast %cst_22 : f32 to vector<16x256xf32>
    %24 = arith.maximumf %5, %23 : vector<16x256xf32>
    %cst_23 = arith.constant 0.000000e+00 : f32
    %25 = vector.broadcast %cst_23 : f32 to vector<16x256xf32>
    %26 = arith.maximumf %11, %25 : vector<16x256xf32>
    %27 = arith.addf %24, %26 : vector<16x256xf32>
    %28 = arith.addf %27, %22 : vector<16x256xf32>
    %c0_24 = arith.constant 0 : index
    %c0_25 = arith.constant 0 : index
    %29 = vector.load %arg15[%c0_24, %c0_25] : memref<256x256xbf16, #tpu.memory_space<vmem>>, vector<256x256xbf16>
    %30 = arith.truncf %28 : vector<16x256xf32> to vector<16x256xbf16>
    %c0_26 = arith.constant 0 : index
    %c0_27 = arith.constant 0 : index
    %c0_28 = arith.constant 0 : index
    %31 = vector.load %arg11[%c0_26, %c0_27, %c0_28] : memref<3x256x256xbf16, #tpu.memory_space<vmem>>, vector<1x256x256xbf16>
    %32 = vector.shape_cast %31 : vector<1x256x256xbf16> to vector<256x256xbf16>
    %cst_29 = arith.constant dense<0.000000e+00> : vector<16x256xf32>
    %33 = tpu.matmul %30, %32, %cst_29 {dimension_numbers = #tpu.dot_dimension_numbers<[1], [0], [0], [1], [0, 0, 1, 1], [], []>} : vector<16x256xbf16>, vector<256x256xbf16>, vector<16x256xf32> -> vector<16x256xf32>
    %c0_30 = arith.constant 0 : index
    %c0_31 = arith.constant 0 : index
    %34 = vector.load %arg12[%c0_30, %c0_31] : memref<3x256xf32, #tpu.memory_space<vmem>>, vector<1x256xf32>
    %35 = vector.shape_cast %34 : vector<1x256xf32> to vector<256xf32>
    %36 = vector.shape_cast %35 : vector<256xf32> to vector<1x256xf32>
    %37 = vector.broadcast %36 : vector<1x256xf32> to vector<16x256xf32>
    %38 = arith.addf %33, %37 : vector<16x256xf32>
    %39 = arith.truncf %38 : vector<16x256xf32> to vector<16x256xbf16>
    %cst_32 = arith.constant dense<0.000000e+00> : vector<16x256xf32>
    %40 = tpu.matmul %39, %29, %cst_32 {dimension_numbers = #tpu.dot_dimension_numbers<[1], [0], [0], [1], [0, 0, 1, 1], [], []>} : vector<16x256xbf16>, vector<256x256xbf16>, vector<16x256xf32> -> vector<16x256xf32>
    %41 = arith.subf %38, %40 : vector<16x256xf32>
    %42 = arith.mulf %41, %41 : vector<16x256xf32>
    %43 = arith.truncf %42 : vector<16x256xf32> to vector<16x256xbf16>
    %cst_33 = arith.constant dense<0.000000e+00> : vector<16x256xf32>
    %44 = tpu.matmul %43, %29, %cst_33 {dimension_numbers = #tpu.dot_dimension_numbers<[1], [0], [0], [1], [0, 0, 1, 1], [], []>} : vector<16x256xbf16>, vector<256x256xbf16>, vector<16x256xf32> -> vector<16x256xf32>
    %cst_34 = arith.constant 9.99999974E-6 : f32
    %45 = vector.broadcast %cst_34 : f32 to vector<16x256xf32>
    %46 = arith.addf %44, %45 : vector<16x256xf32>
    %47 = math.rsqrt %46 : vector<16x256xf32>
    %48 = arith.mulf %41, %47 : vector<16x256xf32>
    %c0_35 = arith.constant 0 : index
    %c0_36 = arith.constant 0 : index
    %49 = vector.load %arg13[%c0_35, %c0_36] : memref<3x256xf32, #tpu.memory_space<vmem>>, vector<1x256xf32>
    %50 = vector.shape_cast %49 : vector<1x256xf32> to vector<256xf32>
    %51 = vector.shape_cast %50 : vector<256xf32> to vector<1x256xf32>
    %52 = vector.broadcast %51 : vector<1x256xf32> to vector<16x256xf32>
    %53 = arith.mulf %48, %52 : vector<16x256xf32>
    %c0_37 = arith.constant 0 : index
    %c0_38 = arith.constant 0 : index
    %54 = vector.load %arg14[%c0_37, %c0_38] : memref<3x256xf32, #tpu.memory_space<vmem>>, vector<1x256xf32>
    %55 = vector.shape_cast %54 : vector<1x256xf32> to vector<256xf32>
    %56 = vector.shape_cast %55 : vector<256xf32> to vector<1x256xf32>
    %57 = vector.broadcast %56 : vector<1x256xf32> to vector<16x256xf32>
    %58 = arith.addf %53, %57 : vector<16x256xf32>
    %cst_39 = arith.constant 0.000000e+00 : f32
    %59 = vector.broadcast %cst_39 : f32 to vector<16x256xf32>
    %60 = arith.maximumf %58, %59 : vector<16x256xf32>
    %61 = arith.addf %28, %60 : vector<16x256xf32>
    %62 = arith.truncf %61 : vector<16x256xf32> to vector<16x256xbf16>
    %c1 = arith.constant 1 : index
    %c0_40 = arith.constant 0 : index
    %c0_41 = arith.constant 0 : index
    %63 = vector.load %arg11[%c1, %c0_40, %c0_41] : memref<3x256x256xbf16, #tpu.memory_space<vmem>>, vector<1x256x256xbf16>
    %64 = vector.shape_cast %63 : vector<1x256x256xbf16> to vector<256x256xbf16>
    %cst_42 = arith.constant dense<0.000000e+00> : vector<16x256xf32>
    %65 = tpu.matmul %62, %64, %cst_42 {dimension_numbers = #tpu.dot_dimension_numbers<[1], [0], [0], [1], [0, 0, 1, 1], [], []>} : vector<16x256xbf16>, vector<256x256xbf16>, vector<16x256xf32> -> vector<16x256xf32>
    %c1_43 = arith.constant 1 : index
    %c0_44 = arith.constant 0 : index
    %66 = vector.load %arg12[%c1_43, %c0_44] : memref<3x256xf32, #tpu.memory_space<vmem>>, vector<1x256xf32>
    %67 = vector.shape_cast %66 : vector<1x256xf32> to vector<256xf32>
    %68 = vector.shape_cast %67 : vector<256xf32> to vector<1x256xf32>
    %69 = vector.broadcast %68 : vector<1x256xf32> to vector<16x256xf32>
    %70 = arith.addf %65, %69 : vector<16x256xf32>
    %71 = arith.truncf %70 : vector<16x256xf32> to vector<16x256xbf16>
    %cst_45 = arith.constant dense<0.000000e+00> : vector<16x256xf32>
    %72 = tpu.matmul %71, %29, %cst_45 {dimension_numbers = #tpu.dot_dimension_numbers<[1], [0], [0], [1], [0, 0, 1, 1], [], []>} : vector<16x256xbf16>, vector<256x256xbf16>, vector<16x256xf32> -> vector<16x256xf32>
    %73 = arith.subf %70, %72 : vector<16x256xf32>
    %74 = arith.mulf %73, %73 : vector<16x256xf32>
    %75 = arith.truncf %74 : vector<16x256xf32> to vector<16x256xbf16>
    %cst_46 = arith.constant dense<0.000000e+00> : vector<16x256xf32>
    %76 = tpu.matmul %75, %29, %cst_46 {dimension_numbers = #tpu.dot_dimension_numbers<[1], [0], [0], [1], [0, 0, 1, 1], [], []>} : vector<16x256xbf16>, vector<256x256xbf16>, vector<16x256xf32> -> vector<16x256xf32>
    %cst_47 = arith.constant 9.99999974E-6 : f32
    %77 = vector.broadcast %cst_47 : f32 to vector<16x256xf32>
    %78 = arith.addf %76, %77 : vector<16x256xf32>
    %79 = math.rsqrt %78 : vector<16x256xf32>
    %80 = arith.mulf %73, %79 : vector<16x256xf32>
    %c1_48 = arith.constant 1 : index
    %c0_49 = arith.constant 0 : index
    %81 = vector.load %arg13[%c1_48, %c0_49] : memref<3x256xf32, #tpu.memory_space<vmem>>, vector<1x256xf32>
    %82 = vector.shape_cast %81 : vector<1x256xf32> to vector<256xf32>
    %83 = vector.shape_cast %82 : vector<256xf32> to vector<1x256xf32>
    %84 = vector.broadcast %83 : vector<1x256xf32> to vector<16x256xf32>
    %85 = arith.mulf %80, %84 : vector<16x256xf32>
    %c1_50 = arith.constant 1 : index
    %c0_51 = arith.constant 0 : index
    %86 = vector.load %arg14[%c1_50, %c0_51] : memref<3x256xf32, #tpu.memory_space<vmem>>, vector<1x256xf32>
    %87 = vector.shape_cast %86 : vector<1x256xf32> to vector<256xf32>
    %88 = vector.shape_cast %87 : vector<256xf32> to vector<1x256xf32>
    %89 = vector.broadcast %88 : vector<1x256xf32> to vector<16x256xf32>
    %90 = arith.addf %85, %89 : vector<16x256xf32>
    %cst_52 = arith.constant 0.000000e+00 : f32
    %91 = vector.broadcast %cst_52 : f32 to vector<16x256xf32>
    %92 = arith.maximumf %90, %91 : vector<16x256xf32>
    %93 = arith.addf %61, %92 : vector<16x256xf32>
    %94 = arith.truncf %93 : vector<16x256xf32> to vector<16x256xbf16>
    %c2 = arith.constant 2 : index
    %c0_53 = arith.constant 0 : index
    %c0_54 = arith.constant 0 : index
    %95 = vector.load %arg11[%c2, %c0_53, %c0_54] : memref<3x256x256xbf16, #tpu.memory_space<vmem>>, vector<1x256x256xbf16>
    %96 = vector.shape_cast %95 : vector<1x256x256xbf16> to vector<256x256xbf16>
    %cst_55 = arith.constant dense<0.000000e+00> : vector<16x256xf32>
    %97 = tpu.matmul %94, %96, %cst_55 {dimension_numbers = #tpu.dot_dimension_numbers<[1], [0], [0], [1], [0, 0, 1, 1], [], []>} : vector<16x256xbf16>, vector<256x256xbf16>, vector<16x256xf32> -> vector<16x256xf32>
    %c2_56 = arith.constant 2 : index
    %c0_57 = arith.constant 0 : index
    %98 = vector.load %arg12[%c2_56, %c0_57] : memref<3x256xf32, #tpu.memory_space<vmem>>, vector<1x256xf32>
    %99 = vector.shape_cast %98 : vector<1x256xf32> to vector<256xf32>
    %100 = vector.shape_cast %99 : vector<256xf32> to vector<1x256xf32>
    %101 = vector.broadcast %100 : vector<1x256xf32> to vector<16x256xf32>
    %102 = arith.addf %97, %101 : vector<16x256xf32>
    %103 = arith.truncf %102 : vector<16x256xf32> to vector<16x256xbf16>
    %cst_58 = arith.constant dense<0.000000e+00> : vector<16x256xf32>
    %104 = tpu.matmul %103, %29, %cst_58 {dimension_numbers = #tpu.dot_dimension_numbers<[1], [0], [0], [1], [0, 0, 1, 1], [], []>} : vector<16x256xbf16>, vector<256x256xbf16>, vector<16x256xf32> -> vector<16x256xf32>
    %105 = arith.subf %102, %104 : vector<16x256xf32>
    %106 = arith.mulf %105, %105 : vector<16x256xf32>
    %107 = arith.truncf %106 : vector<16x256xf32> to vector<16x256xbf16>
    %cst_59 = arith.constant dense<0.000000e+00> : vector<16x256xf32>
    %108 = tpu.matmul %107, %29, %cst_59 {dimension_numbers = #tpu.dot_dimension_numbers<[1], [0], [0], [1], [0, 0, 1, 1], [], []>} : vector<16x256xbf16>, vector<256x256xbf16>, vector<16x256xf32> -> vector<16x256xf32>
    %cst_60 = arith.constant 9.99999974E-6 : f32
    %109 = vector.broadcast %cst_60 : f32 to vector<16x256xf32>
    %110 = arith.addf %108, %109 : vector<16x256xf32>
    %111 = math.rsqrt %110 : vector<16x256xf32>
    %112 = arith.mulf %105, %111 : vector<16x256xf32>
    %c2_61 = arith.constant 2 : index
    %c0_62 = arith.constant 0 : index
    %113 = vector.load %arg13[%c2_61, %c0_62] : memref<3x256xf32, #tpu.memory_space<vmem>>, vector<1x256xf32>
    %114 = vector.shape_cast %113 : vector<1x256xf32> to vector<256xf32>
    %115 = vector.shape_cast %114 : vector<256xf32> to vector<1x256xf32>
    %116 = vector.broadcast %115 : vector<1x256xf32> to vector<16x256xf32>
    %117 = arith.mulf %112, %116 : vector<16x256xf32>
    %c2_63 = arith.constant 2 : index
    %c0_64 = arith.constant 0 : index
    %118 = vector.load %arg14[%c2_63, %c0_64] : memref<3x256xf32, #tpu.memory_space<vmem>>, vector<1x256xf32>
    %119 = vector.shape_cast %118 : vector<1x256xf32> to vector<256xf32>
    %120 = vector.shape_cast %119 : vector<256xf32> to vector<1x256xf32>
    %121 = vector.broadcast %120 : vector<1x256xf32> to vector<16x256xf32>
    %122 = arith.addf %117, %121 : vector<16x256xf32>
    %cst_65 = arith.constant 0.000000e+00 : f32
    %123 = vector.broadcast %cst_65 : f32 to vector<16x256xf32>
    %124 = arith.maximumf %122, %123 : vector<16x256xf32>
    %125 = arith.addf %93, %124 : vector<16x256xf32>
    %126 = arith.truncf %125 : vector<16x256xf32> to vector<16x256xbf16>
    %cst_66 = arith.constant dense<0.000000e+00> : vector<16x256xf32>
    %127 = tpu.matmul %126, %29, %cst_66 {dimension_numbers = #tpu.dot_dimension_numbers<[1], [0], [0], [1], [0, 0, 1, 1], [], []>} : vector<16x256xbf16>, vector<256x256xbf16>, vector<16x256xf32> -> vector<16x256xf32>
    %128 = arith.subf %125, %127 : vector<16x256xf32>
    %129 = arith.mulf %128, %128 : vector<16x256xf32>
    %130 = arith.truncf %129 : vector<16x256xf32> to vector<16x256xbf16>
    %cst_67 = arith.constant dense<0.000000e+00> : vector<16x256xf32>
    %131 = tpu.matmul %130, %29, %cst_67 {dimension_numbers = #tpu.dot_dimension_numbers<[1], [0], [0], [1], [0, 0, 1, 1], [], []>} : vector<16x256xbf16>, vector<256x256xbf16>, vector<16x256xf32> -> vector<16x256xf32>
    %cst_68 = arith.constant 9.99999974E-6 : f32
    %132 = vector.broadcast %cst_68 : f32 to vector<16x256xf32>
    %133 = arith.addf %131, %132 : vector<16x256xf32>
    %134 = math.rsqrt %133 : vector<16x256xf32>
    %135 = arith.mulf %128, %134 : vector<16x256xf32>
    %136 = arith.truncf %135 : vector<16x256xf32> to vector<16x256xbf16>
    %c0_69 = arith.constant 0 : index
    %c0_70 = arith.constant 0 : index
    %137 = vector.load %arg16[%c0_69, %c0_70] : memref<256x128xbf16, #tpu.memory_space<vmem>>, vector<256x128xbf16>
    %cst_71 = arith.constant dense<0.000000e+00> : vector<16x128xf32>
    %138 = tpu.matmul %136, %137, %cst_71 {dimension_numbers = #tpu.dot_dimension_numbers<[1], [0], [0], [1], [0, 0, 1, 1], [], []>} : vector<16x256xbf16>, vector<256x128xbf16>, vector<16x128xf32> -> vector<16x128xf32>
    %c0_72 = arith.constant 0 : index
    %c0_73 = arith.constant 0 : index
    %139 = vector.load %arg17[%c0_72, %c0_73] : memref<1x128xf32, #tpu.memory_space<vmem>>, vector<1x128xf32>
    %140 = vector.broadcast %139 : vector<1x128xf32> to vector<16x128xf32>
    %141 = arith.addf %138, %140 : vector<16x128xf32>
    %c0_74 = arith.constant 0 : index
    %c0_75 = arith.constant 0 : index
    %142 = vector.load %arg18[%c0_74, %c0_75] : memref<16x128xf32, #tpu.memory_space<vmem>>, vector<16x128xf32>
    tpu.vector_store %arg18[%c0_74, %c0_75], %141 {strides = array<i32>} : memref<16x128xf32, #tpu.memory_space<vmem>>, vector<16x128xf32>,
    return
  }
  func.func @transform_0(%arg0: i32) -> (i32, i32) {
    %c0_i32 = arith.constant 0 : i32
    %c0_i32_0 = arith.constant 0 : i32
    return %arg0, %c0_i32 : i32, i32
  }
  func.func @transform_1(%arg0: i32) -> (i32, i32) {
    %c0_i32 = arith.constant 0 : i32
    %c0_i32_0 = arith.constant 0 : i32
    return %arg0, %c0_i32 : i32, i32
  }
  func.func @transform_2(%arg0: i32) -> (i32, i32) {
    %c0_i32 = arith.constant 0 : i32
    %c0_i32_0 = arith.constant 0 : i32
    return %arg0, %c0_i32 : i32, i32
  }
  func.func @transform_3(%arg0: i32) -> (i32, i32) {
    %c0_i32 = arith.constant 0 : i32
    %c0_i32_0 = arith.constant 0 : i32
    %c0_i32_1 = arith.constant 0 : i32
    return %c0_i32, %c0_i32_0 : i32, i32
  }
  func.func @transform_4(%arg0: i32) -> (i32, i32) {
    %c0_i32 = arith.constant 0 : i32
    %c0_i32_0 = arith.constant 0 : i32
    %c0_i32_1 = arith.constant 0 : i32
    return %c0_i32, %c0_i32_0 : i32, i32
  }
  func.func @transform_5(%arg0: i32) -> (i32, i32) {
    %c0_i32 = arith.constant 0 : i32
    %c0_i32_0 = arith.constant 0 : i32
    %c0_i32_1 = arith.constant 0 : i32
    return %c0_i32, %c0_i32_0 : i32, i32
  }
  func.func @transform_6(%arg0: i32) -> (i32, i32) {
    %c0_i32 = arith.constant 0 : i32
    %c0_i32_0 = arith.constant 0 : i32
    %c0_i32_1 = arith.constant 0 : i32
    return %c0_i32, %c0_i32_0 : i32, i32
  }
  func.func @transform_7(%arg0: i32) -> (i32, i32) {
    %c0_i32 = arith.constant 0 : i32
    %c0_i32_0 = arith.constant 0 : i32
    %c0_i32_1 = arith.constant 0 : i32
    return %c0_i32, %c0_i32_0 : i32, i32
  }
  func.func @transform_8(%arg0: i32) -> (i32, i32) {
    %c0_i32 = arith.constant 0 : i32
    %c0_i32_0 = arith.constant 0 : i32
    %c0_i32_1 = arith.constant 0 : i32
    return %c0_i32, %c0_i32_0 : i32, i32
  }
  func.func @transform_9(%arg0: i32) -> (i32, i32) {
    %c0_i32 = arith.constant 0 : i32
    %c0_i32_0 = arith.constant 0 : i32
    %c0_i32_1 = arith.constant 0 : i32
    return %c0_i32, %c0_i32_0 : i32, i32
  }
  func.func @transform_10(%arg0: i32) -> (i32, i32, i32) {
    %c0_i32 = arith.constant 0 : i32
    %c0_i32_0 = arith.constant 0 : i32
    %c0_i32_1 = arith.constant 0 : i32
    %c0_i32_2 = arith.constant 0 : i32
    return %c0_i32, %c0_i32_0, %c0_i32_1 : i32, i32, i32
  }
  func.func @transform_11(%arg0: i32) -> (i32, i32) {
    %c0_i32 = arith.constant 0 : i32
    %c0_i32_0 = arith.constant 0 : i32
    %c0_i32_1 = arith.constant 0 : i32
    return %c0_i32, %c0_i32_0 : i32, i32
  }
  func.func @transform_12(%arg0: i32) -> (i32, i32) {
    %c0_i32 = arith.constant 0 : i32
    %c0_i32_0 = arith.constant 0 : i32
    %c0_i32_1 = arith.constant 0 : i32
    return %c0_i32, %c0_i32_0 : i32, i32
  }
  func.func @transform_13(%arg0: i32) -> (i32, i32) {
    %c0_i32 = arith.constant 0 : i32
    %c0_i32_0 = arith.constant 0 : i32
    %c0_i32_1 = arith.constant 0 : i32
    return %c0_i32, %c0_i32_0 : i32, i32
  }
  func.func @transform_14(%arg0: i32) -> (i32, i32) {
    %c0_i32 = arith.constant 0 : i32
    %c0_i32_0 = arith.constant 0 : i32
    %c0_i32_1 = arith.constant 0 : i32
    return %c0_i32, %c0_i32_0 : i32, i32
  }
  func.func @transform_15(%arg0: i32) -> (i32, i32) {
    %c0_i32 = arith.constant 0 : i32
    %c0_i32_0 = arith.constant 0 : i32
    %c0_i32_1 = arith.constant 0 : i32
    return %c0_i32, %c0_i32_0 : i32, i32
  }
  func.func @transform_16(%arg0: i32) -> (i32, i32) {
    %c0_i32 = arith.constant 0 : i32
    %c0_i32_0 = arith.constant 0 : i32
    %c0_i32_1 = arith.constant 0 : i32
    return %c0_i32, %c0_i32_0 : i32, i32
  }
  func.func @transform_17(%arg0: i32) -> (i32, i32) {
    %c0_i32 = arith.constant 0 : i32
    %c0_i32_0 = arith.constant 0 : i32
    return %arg0, %c0_i32 : i32, i32
  }
}

</mosaic_0001>

<llo_original>
// kernel: conditional_diffusion_forward.1
$region0: #{conditional_diffusion_forward.1}
  #allocation0 [shape = 'u32[]', space=smem, size = 0x4, offset = 0x4, fixed_abs, tag = 'smem constant byte address 0x4 - core index']
  #allocation1 [shape = 'u32[144,128]{1,0:T(1,128)}', space=vmem, size = 0x12000, scoped, tag = 'internal scratch']
  %s0 = inlined_call_operand.vmem [shape: bf16[16,128], index: 0, kind: input, shape index: {}]
  %s1 = inlined_call_operand.vmem [shape: bf16[16,64], index: 1, kind: input, shape index: {}]
  %s2 = inlined_call_operand.vmem [shape: bf16[16,16], index: 2, kind: input, shape index: {}]
  %s3 = inlined_call_operand.hbm [shape: bf16[128,256], index: 3, kind: input, shape index: {}]
  %s4 = inlined_call_operand.vmem [shape: f32[1,256], index: 4, kind: input, shape index: {}]
  %s5 = inlined_call_operand.vmem [shape: bf16[64,256], index: 5, kind: input, shape index: {}]
  %s6 = inlined_call_operand.vmem [shape: f32[1,256], index: 6, kind: input, shape index: {}]
  %s7 = inlined_call_operand.vmem [shape: bf16[16,128], index: 7, kind: input, shape index: {}]
  %s8 = inlined_call_operand.vmem [shape: f32[1,128], index: 8, kind: input, shape index: {}]
  %s9 = inlined_call_operand.hbm [shape: bf16[128,256], index: 9, kind: input, shape index: {}]
  %s10 = inlined_call_operand.hbm [shape: bf16[3,256,256], index: 10, kind: input, shape index: {}]
  %s11 = inlined_call_operand.vmem [shape: f32[3,256], index: 11, kind: input, shape index: {}]
  %s12 = inlined_call_operand.vmem [shape: f32[3,256], index: 12, kind: input, shape index: {}]
  %s13 = inlined_call_operand.vmem [shape: f32[3,256], index: 13, kind: input, shape index: {}]
  %s14 = inlined_call_operand.vmem [shape: bf16[256,256], index: 14, kind: input, shape index: {}]
  %s15 = inlined_call_operand.hbm [shape: bf16[256,128], index: 15, kind: input, shape index: {}]
  %s16 = inlined_call_operand.vmem [shape: f32[1,128], index: 16, kind: input, shape index: {}]
  %s17 = inlined_call_operand.vmem [shape: f32[16,128], index: 17, kind: output, shape index: {}]
  %s18 = sld [smem:[#allocation0]]
  $region94: #{conditional_diffusion_forward.1} parent=0
    _
  %s20 = ssub.s32 1, %s18
  %s21 = scalar_select 0, %s20, %s18
  $region1: #{conditional_diffusion_forward.1} parent=0
    #allocation2 [shape = 'u8[65536]{0}', space=vmem, size = 0x10000, scoped, tag = 'input window, operand 3, single buffered']
    #allocation3 [shape = 's32[1]{0}', space=sflag, size = 0x4, scoped, tag = 'scoped memory for conditional_diffusion_forward.1']
    #allocation4 [shape = 'u8[65536]{0}', space=vmem, size = 0x10000, scoped, tag = 'input window, operand 9, single buffered']
    #allocation5 [shape = 's32[1]{0}', space=sflag, size = 0x4, scoped, tag = 'scoped memory for conditional_diffusion_forward.1']
    #allocation6 [shape = 'u8[393216]{0}', space=vmem, size = 0x60000, scoped, tag = 'input window, operand 10, single buffered']
    #allocation7 [shape = 'u8[65536]{0}', space=vmem, size = 0x10000, scoped, tag = 'input window, operand 15, single buffered']
    #allocation8 [shape = 's32[1]{0}', space=sflag, size = 0x4, scoped, tag = 'scoped memory for conditional_diffusion_forward.1']
    %22 = vsyncpa [#allocation3], 0
    %23 = vsyncpa [#allocation5], 0
    %24 = vsyncpa [#allocation8], 0
    // Predicated region
    $region2: #{conditional_diffusion_forward.1} parent=1 // pred_check
      _
    $region3: #{conditional_diffusion_forward.1} parent=1 // pred_check_branch
      %26 = sbr.rel (0) target = $region5
    $region4: #{conditional_diffusion_forward.1} parent=1 // pred_region
      _
    $region5: #{conditional_diffusion_forward.1} parent=1 // pred_fallthru
      _
    // Predicated region
    $region6: #{conditional_diffusion_forward.1} parent=1 // pred_check
      _
    $region7: #{conditional_diffusion_forward.1} parent=1 // pred_check_branch
      %28 = sbr.rel (0) target = $region9
    $region8: #{conditional_diffusion_forward.1} parent=1 // pred_region
      _
    $region9: #{conditional_diffusion_forward.1} parent=1 // pred_fallthru
      _
    // Predicated region
    $region10: #{conditional_diffusion_forward.1} parent=1 // pred_check
      _
    $region11: #{conditional_diffusion_forward.1} parent=1 // pred_check_branch
      %30 = sbr.rel (0) target = $region13
    $region12: #{conditional_diffusion_forward.1} parent=1 // pred_region
      _
    $region13: #{conditional_diffusion_forward.1} parent=1 // pred_fallthru
      _
    // Predicated region
    $region14: #{conditional_diffusion_forward.1} parent=1 // pred_check
      _
    $region15: #{conditional_diffusion_forward.1} parent=1 // pred_check_branch
      %32 = sbr.rel (0) target = $region17
    $region16: #{conditional_diffusion_forward.1} parent=1 // pred_region
      %s34 = ssub.s32 2048, 2048
      %35 = vsyncadd [#allocation3], %s34
      %s36 = sshll.u32 [#allocation2], 4
      %s37 = int_to_ptr.vmem [resolvable:$true] %s36
      %42 = dma.hbm_to_vmem [thread:$0]  %s3, 2048, %s37, [#allocation3], 128, 128, 8
    $region17: #{conditional_diffusion_forward.1} parent=1 // pred_fallthru
      _
    // Predicated region
    $region18: #{conditional_diffusion_forward.1} parent=1 // pred_check
      _
    $region19: #{conditional_diffusion_forward.1} parent=1 // pred_check_branch
      %44 = sbr.rel (0) target = $region21
    $region20: #{conditional_diffusion_forward.1} parent=1 // pred_region
      _
    $region21: #{conditional_diffusion_forward.1} parent=1 // pred_fallthru
      _
    // Predicated region
    $region22: #{conditional_diffusion_forward.1} parent=1 // pred_check
      _
    $region23: #{conditional_diffusion_forward.1} parent=1 // pred_check_branch
      %46 = sbr.rel (0) target = $region25
    $region24: #{conditional_diffusion_forward.1} parent=1 // pred_region
      _
    $region25: #{conditional_diffusion_forward.1} parent=1 // pred_fallthru
      _
    // Predicated region
    $region26: #{conditional_diffusion_forward.1} parent=1 // pred_check
      _
    $region27: #{conditional_diffusion_forward.1} parent=1 // pred_check_branch
      %48 = sbr.rel (0) target = $region29
    $region28: #{conditional_diffusion_forward.1} parent=1 // pred_region
      _
    $region29: #{conditional_diffusion_forward.1} parent=1 // pred_fallthru
      _
    // Predicated region
    $region30: #{conditional_diffusion_forward.1} parent=1 // pred_check
      _
    $region31: #{conditional_diffusion_forward.1} parent=1 // pred_check_branch
      %50 = sbr.rel (0) target = $region33
    $region32: #{conditional_diffusion_forward.1} parent=1 // pred_region
      _
    $region33: #{conditional_diffusion_forward.1} parent=1 // pred_fallthru
      _
    // Predicated region
    $region34: #{conditional_diffusion_forward.1} parent=1 // pred_check
      _
    $region35: #{conditional_diffusion_forward.1} parent=1 // pred_check_branch
      %52 = sbr.rel (0) target = $region37
    $region36: #{conditional_diffusion_forward.1} parent=1 // pred_region
      _
    $region37: #{conditional_diffusion_forward.1} parent=1 // pred_fallthru
      _
    // Predicated region
    $region38: #{conditional_diffusion_forward.1} parent=1 // pred_check
      _
    $region39: #{conditional_diffusion_forward.1} parent=1 // pred_check_branch
      %54 = sbr.rel (0) target = $region41
    $region40: #{conditional_diffusion_forward.1} parent=1 // pred_region
      %s56 = ssub.s32 2048, 2048
      %57 = vsyncadd [#allocation5], %s56
      %s58 = sshll.u32 [#allocation4], 4
      %s59 = int_to_ptr.vmem [resolvable:$true] %s58
      %64 = dma.hbm_to_vmem [thread:$0]  %s9, 2048, %s59, [#allocation5], 128, 128, 8
    $region41: #{conditional_diffusion_forward.1} parent=1 // pred_fallthru
      _
    // Predicated region
    $region42: #{conditional_diffusion_forward.1} parent=1 // pred_check
      _
    $region43: #{conditional_diffusion_forward.1} parent=1 // pred_check_branch
      %66 = sbr.rel (0) target = $region45
    $region44: #{conditional_diffusion_forward.1} parent=1 // pred_region
      %s68 = ssub.s32 12288, 12288
      %69 = vsyncadd [#allocation5], %s68
      %s70 = sshll.u32 [#allocation6], 4
      %s71 = int_to_ptr.vmem [resolvable:$true] %s70
      %76 = dma.hbm_to_vmem [thread:$0]  %s10, 12288, %s71, [#allocation5], 128, 128, 8
    $region45: #{conditional_diffusion_forward.1} parent=1 // pred_fallthru
      _
    // Predicated region
    $region46: #{conditional_diffusion_forward.1} parent=1 // pred_check
      _
    $region47: #{conditional_diffusion_forward.1} parent=1 // pred_check_branch
      %78 = sbr.rel (0) target = $region49
    $region48: #{conditional_diffusion_forward.1} parent=1 // pred_region
      _
    $region49: #{conditional_diffusion_forward.1} parent=1 // pred_fallthru
      _
    // Predicated region
    $region50: #{conditional_diffusion_forward.1} parent=1 // pred_check
      _
    $region51: #{conditional_diffusion_forward.1} parent=1 // pred_check_branch
      %80 = sbr.rel (0) target = $region53
    $region52: #{conditional_diffusion_forward.1} parent=1 // pred_region
      _
    $region53: #{conditional_diffusion_forward.1} parent=1 // pred_fallthru
      _
    // Predicated region
    $region54: #{conditional_diffusion_forward.1} parent=1 // pred_check
      _
    $region55: #{conditional_diffusion_forward.1} parent=1 // pred_check_branch
      %82 = sbr.rel (0) target = $region57
    $region56: #{conditional_diffusion_forward.1} parent=1 // pred_region
      _
    $region57: #{conditional_diffusion_forward.1} parent=1 // pred_fallthru
      _
    // Predicated region
    $region58: #{conditional_diffusion_forward.1} parent=1 // pred_check
      _
    $region59: #{conditional_diffusion_forward.1} parent=1 // pred_check_branch
      %84 = sbr.rel (0) target = $region61
    $region60: #{conditional_diffusion_forward.1} parent=1 // pred_region
      _
    $region61: #{conditional_diffusion_forward.1} parent=1 // pred_fallthru
      _
    // Predicated region
    $region62: #{conditional_diffusion_forward.1} parent=1 // pred_check
      _
    $region63: #{conditional_diffusion_forward.1} parent=1 // pred_check_branch
      %86 = sbr.rel (0) target = $region65
    $region64: #{conditional_diffusion_forward.1} parent=1 // pred_region
      %s88 = ssub.s32 2048, 2048
      %89 = vsyncadd [#allocation8], %s88
      %s90 = sshll.u32 [#allocation7], 4
      %s91 = int_to_ptr.vmem [resolvable:$true] %s90
      %96 = dma.hbm_to_vmem [thread:$0]  %s15, 2048, %s91, [#allocation8], 64, 64, 4
    $region65: #{conditional_diffusion_forward.1} parent=1 // pred_fallthru
      _
    // Predicated region
    $region66: #{conditional_diffusion_forward.1} parent=1 // pred_check
      _
    $region67: #{conditional_diffusion_forward.1} parent=1 // pred_check_branch
      %98 = sbr.rel (0) target = $region69
    $region68: #{conditional_diffusion_forward.1} parent=1 // pred_region
      _
    $region69: #{conditional_diffusion_forward.1} parent=1 // pred_fallthru
      _
    // Predicated region
    $region70: #{conditional_diffusion_forward.1} parent=1 // pred_check
      _
    $region71: #{conditional_diffusion_forward.1} parent=1 // pred_check_branch
      %100 = sbr.rel (0) target = $region73
    $region72: #{conditional_diffusion_forward.1} parent=1 // pred_region
      %101 = dma.done [#allocation3], 2048
    $region73: #{conditional_diffusion_forward.1} parent=1 // pred_fallthru
      _
    // Predicated region
    $region74: #{conditional_diffusion_forward.1} parent=1 // pred_check
      _
    $region75: #{conditional_diffusion_forward.1} parent=1 // pred_check_branch
      %103 = sbr.rel (0) target = $region77
    $region76: #{conditional_diffusion_forward.1} parent=1 // pred_region
      %104 = dma.done [#allocation5], 2048
    $region77: #{conditional_diffusion_forward.1} parent=1 // pred_fallthru
      _
    // Predicated region
    $region78: #{conditional_diffusion_forward.1} parent=1 // pred_check
      _
    $region79: #{conditional_diffusion_forward.1} parent=1 // pred_check_branch
      %106 = sbr.rel (0) target = $region81
    $region80: #{conditional_diffusion_forward.1} parent=1 // pred_region
      %107 = dma.done [#allocation5], 12288
    $region81: #{conditional_diffusion_forward.1} parent=1 // pred_fallthru
      _
    // Predicated region
    $region82: #{conditional_diffusion_forward.1} parent=1 // pred_check
      _
    $region83: #{conditional_diffusion_forward.1} parent=1 // pred_check_branch
      %109 = sbr.rel (0) target = $region85
    $region84: #{conditional_diffusion_forward.1} parent=1 // pred_region
      %110 = dma.done [#allocation8], 2048
    $region85: #{conditional_diffusion_forward.1} parent=1 // pred_fallthru
      _
    %v112 = vld [vmem:[%s0] sm:$0xf]
    %v113 = vld [vmem:[%s0 + $0x4] sm:$0xf]
    %v114 = vld [vmem:[#allocation2] sm:$0xff]
    %v115 = vld [vmem:[#allocation2 + $0x8] sm:$0xff]
    %v116 = vld [vmem:[#allocation2 + $0x10] sm:$0xff]
    %v117 = vld [vmem:[#allocation2 + $0x18] sm:$0xff]
    %v118 = vld [vmem:[#allocation2 + $0x20] sm:$0xff]
    %v119 = vld [vmem:[#allocation2 + $0x28] sm:$0xff]
    %v120 = vld [vmem:[#allocation2 + $0x30] sm:$0xff]
    %v121 = vld [vmem:[#allocation2 + $0x38] sm:$0xff]
    %v122 = vld [vmem:[#allocation2 + $0x40] sm:$0xff]
    %v123 = vld [vmem:[#allocation2 + $0x48] sm:$0xff]
    %v124 = vld [vmem:[#allocation2 + $0x50] sm:$0xff]
    %v125 = vld [vmem:[#allocation2 + $0x58] sm:$0xff]
    %v126 = vld [vmem:[#allocation2 + $0x60] sm:$0xff]
    %v127 = vld [vmem:[#allocation2 + $0x68] sm:$0xff]
    %v128 = vld [vmem:[#allocation2 + $0x70] sm:$0xff]
    %v129 = vld [vmem:[#allocation2 + $0x78] sm:$0xff]
    %v130 = vld [vmem:[%s4] sm:$0x3]
    %v132 = vlaneseq
    %v133 = vshrl.u32 %v132, 7
    %v134 = vsub.s32 0, %v133
    %v135 = vrot.slane %v130, %v134
    %v136 = vlaneseq
    %v137 = vshrl.u32 %v136, 7
    %v138 = vsub.s32 1, %v137
    %v139 = vrot.slane %v130, %v138
    %v144 = vunpack.c.l.b16 %v112
    %v145 = vunpack.c.l.b16 %v113
    %v146 = vpack.c.b16 %v145, %v144
    %v164 = vunpack.c.l.b16 %v114
    %v165 = vunpack.c.h.b16 %v114
    %v166 = vunpack.c.l.b16 %v115
    %v167 = vunpack.c.h.b16 %v115
    %v168 = vunpack.c.l.b16 %v116
    %v169 = vunpack.c.h.b16 %v116
    %v170 = vunpack.c.l.b16 %v117
    %v171 = vunpack.c.h.b16 %v117
    %v172 = vunpack.c.l.b16 %v118
    %v173 = vunpack.c.h.b16 %v118
    %v174 = vunpack.c.l.b16 %v119
    %v175 = vunpack.c.h.b16 %v119
    %v176 = vunpack.c.l.b16 %v120
    %v177 = vunpack.c.h.b16 %v120
    %v178 = vunpack.c.l.b16 %v121
    %v179 = vunpack.c.h.b16 %v121
    %v180 = vunpack.c.l.b16 %v122
    %v181 = vunpack.c.h.b16 %v122
    %v182 = vunpack.c.l.b16 %v123
    %v183 = vunpack.c.h.b16 %v123
    %v184 = vunpack.c.l.b16 %v124
    %v185 = vunpack.c.h.b16 %v124
    %v186 = vunpack.c.l.b16 %v125
    %v187 = vunpack.c.h.b16 %v125
    %v188 = vunpack.c.l.b16 %v126
    %v189 = vunpack.c.h.b16 %v126
    %v190 = vunpack.c.l.b16 %v127
    %v191 = vunpack.c.h.b16 %v127
    %v192 = vunpack.c.l.b16 %v128
    %v193 = vunpack.c.h.b16 %v128
    %v194 = vunpack.c.l.b16 %v129
    %v195 = vunpack.c.h.b16 %v129
    %v196 = vpack.c.b16 %v166, %v164
    %v197 = vpack.c.b16 %v167, %v165
    %v198 = vpack.c.b16 %v170, %v168
    %v199 = vpack.c.b16 %v171, %v169
    %v200 = vpack.c.b16 %v174, %v172
    %v201 = vpack.c.b16 %v175, %v173
    %v202 = vpack.c.b16 %v178, %v176
    %v203 = vpack.c.b16 %v179, %v177
    %v204 = vpack.c.b16 %v182, %v180
    %v205 = vpack.c.b16 %v183, %v181
    %v206 = vpack.c.b16 %v186, %v184
    %v207 = vpack.c.b16 %v187, %v185
    %v208 = vpack.c.b16 %v190, %v188
    %v209 = vpack.c.b16 %v191, %v189
    %v210 = vpack.c.b16 %v194, %v192
    %v211 = vpack.c.b16 %v195, %v193
    %228 = vmatprep.subr.bf16.mxu0 %v197
    %229 = vmatpush1.bf16.msra.mxu0 %v196
    %230 = vmatprep.subr.bf16.mxu0 %v199
    %231 = vmatpush1.bf16.msra.mxu0 %v198
    %232 = vmatprep.subr.bf16.mxu0 %v201
    %233 = vmatpush1.bf16.msra.mxu0 %v200
    %234 = vmatprep.subr.bf16.mxu0 %v203
    %235 = vmatpush1.bf16.msra.mxu0 %v202
    %236 = vmatprep.subr.bf16.mxu0 %v205
    %237 = vmatpush1.bf16.msra.mxu0 %v204
    %238 = vmatprep.subr.bf16.mxu0 %v207
    %239 = vmatpush1.bf16.msra.mxu0 %v206
    %240 = vmatprep.subr.bf16.mxu0 %v209
    %241 = vmatpush1.bf16.msra.mxu0 %v208
    %242 = vmatprep.subr.bf16.mxu0 %v211
    %243 = vmatpush1.bf16.msra.mxu0 %v210
    %244 = vmatprep.subr.bf16.mxu0 0
    %245 = vmatpush1.bf16.msra.mxu0 0
    %246 = vmatprep.subr.bf16.mxu0 0
    %247 = vmatpush1.bf16.msra.mxu0 0
    %248 = vmatprep.subr.bf16.mxu0 0
    %249 = vmatpush1.bf16.msra.mxu0 0
    %250 = vmatprep.subr.bf16.mxu0 0
    %251 = vmatpush1.bf16.msra.mxu0 0
    %252 = vmatprep.subr.bf16.mxu0 0
    %253 = vmatpush1.bf16.msra.mxu0 0
    %254 = vmatprep.subr.bf16.mxu0 0
    %255 = vmatpush1.bf16.msra.mxu0 0
    %256 = vmatprep.subr.bf16.mxu0 0
    %257 = vmatpush1.bf16.msra.mxu0 0
    %258 = vmatprep.subr.bf16.mxu0 0
    %259 = vmatpush1.bf16.msra.mxu0 0
    %260 = vmatprep.mubr.bf16.mxu0 0
    %261 = vmatmul.mubr.bf16.gmra.mrb[0].mxu0 %v146
    %v262 = vpop.f32.mrb[0].mxu0
    %v263 = vadd.f32 %v135, %v262
    %v264 = vpop.f32.mrb[0].mxu0
    %v265 = vadd.f32 %v139, %v264
    %v266 = vpop.f32.mrb[0].mxu0
    %v267 = vadd.f32 %v135, %v266
    %v268 = vpop.f32.mrb[0].mxu0
    %v269 = vadd.f32 %v139, %v268
    %270 = vdwg.mxu0
    %v271 = vld [vmem:[%s1] sm:$0xf]
    %v272 = vld [vmem:[%s1 + $0x4] sm:$0xf]
    %v273 = vld [vmem:[%s5] sm:$0xff]
    %v274 = vld [vmem:[%s5 + $0x8] sm:$0xff]
    %v275 = vld [vmem:[%s5 + $0x10] sm:$0xff]
    %v276 = vld [vmem:[%s5 + $0x18] sm:$0xff]
    %v277 = vld [vmem:[%s5 + $0x20] sm:$0xff]
    %v278 = vld [vmem:[%s5 + $0x28] sm:$0xff]
    %v279 = vld [vmem:[%s5 + $0x30] sm:$0xff]
    %v280 = vld [vmem:[%s5 + $0x38] sm:$0xff]
    %v281 = vld [vmem:[%s6] sm:$0x3]
    %v283 = vlaneseq
    %v284 = vshrl.u32 %v283, 7
    %v285 = vsub.s32 0, %v284
    %v286 = vrot.slane %v281, %v285
    %v287 = vlaneseq
    %v288 = vshrl.u32 %v287, 7
    %v289 = vsub.s32 1, %v288
    %v290 = vrot.slane %v281, %v289
    %v295 = vunpack.c.l.b16 %v271
    %v296 = vunpack.c.l.b16 %v272
    %v297 = vpack.c.b16 %v296, %v295
    %v306 = vunpack.c.l.b16 %v273
    %v307 = vunpack.c.h.b16 %v273
    %v308 = vunpack.c.l.b16 %v274
    %v309 = vunpack.c.h.b16 %v274
    %v310 = vunpack.c.l.b16 %v275
    %v311 = vunpack.c.h.b16 %v275
    %v312 = vunpack.c.l.b16 %v276
    %v313 = vunpack.c.h.b16 %v276
    %v314 = vunpack.c.l.b16 %v277
    %v315 = vunpack.c.h.b16 %v277
    %v316 = vunpack.c.l.b16 %v278
    %v317 = vunpack.c.h.b16 %v278
    %v318 = vunpack.c.l.b16 %v279
    %v319 = vunpack.c.h.b16 %v279
    %v320 = vunpack.c.l.b16 %v280
    %v321 = vunpack.c.h.b16 %v280
    %v322 = vpack.c.b16 %v308, %v306
    %v323 = vpack.c.b16 %v309, %v307
    %v324 = vpack.c.b16 %v312, %v310
    %v325 = vpack.c.b16 %v313, %v311
    %v326 = vpack.c.b16 %v316, %v314
    %v327 = vpack.c.b16 %v317, %v315
    %v328 = vpack.c.b16 %v320, %v318
    %v329 = vpack.c.b16 %v321, %v319
    %vm338 = vcmask 523264
    %v340 = vsel %vm338, %v297, 0
    %342 = vmatprep.subr.bf16.mxu0 %v323
    %343 = vmatpush1.bf16.msra.mxu0 %v322
    %344 = vmatprep.subr.bf16.mxu0 %v325
    %345 = vmatpush1.bf16.msra.mxu0 %v324
    %346 = vmatprep.subr.bf16.mxu0 %v327
    %347 = vmatpush1.bf16.msra.mxu0 %v326
    %348 = vmatprep.subr.bf16.mxu0 %v329
    %349 = vmatpush1.bf16.msra.mxu0 %v328
    %350 = vmatprep.subr.bf16.mxu0 0
    %351 = vmatpush1.bf16.msra.mxu0 0
    %352 = vmatprep.subr.bf16.mxu0 0
    %353 = vmatpush1.bf16.msra.mxu0 0
    %354 = vmatprep.subr.bf16.mxu0 0
    %355 = vmatpush1.bf16.msra.mxu0 0
    %356 = vmatprep.subr.bf16.mxu0 0
    %357 = vmatpush1.bf16.msra.mxu0 0
    %358 = vmatprep.subr.bf16.mxu0 0
    %359 = vmatpush1.bf16.msra.mxu0 0
    %360 = vmatprep.subr.bf16.mxu0 0
    %361 = vmatpush1.bf16.msra.mxu0 0
    %362 = vmatprep.subr.bf16.mxu0 0
    %363 = vmatpush1.bf16.msra.mxu0 0
    %364 = vmatprep.subr.bf16.mxu0 0
    %365 = vmatpush1.bf16.msra.mxu0 0
    %366 = vmatprep.subr.bf16.mxu0 0
    %367 = vmatpush1.bf16.msra.mxu0 0
    %368 = vmatprep.subr.bf16.mxu0 0
    %369 = vmatpush1.bf16.msra.mxu0 0
    %370 = vmatprep.subr.bf16.mxu0 0
    %371 = vmatpush1.bf16.msra.mxu0 0
    %372 = vmatprep.subr.bf16.mxu0 0
    %373 = vmatpush1.bf16.msra.mxu0 0
    %374 = vmatprep.mubr.bf16.mxu0 0
    %375 = vmatmul.mubr.bf16.gmra.mrb[0].mxu0 %v340
    %v376 = vpop.f32.mrb[0].mxu0
    %v377 = vadd.f32 %v286, %v376
    %v378 = vpop.f32.mrb[0].mxu0
    %v379 = vadd.f32 %v290, %v378
    %v380 = vpop.f32.mrb[0].mxu0
    %v381 = vadd.f32 %v286, %v380
    %v382 = vpop.f32.mrb[0].mxu0
    %v383 = vadd.f32 %v290, %v382
    %384 = vdwg.mxu0
    %v385 = vld [vmem:[%s2] sm:$0xf]
    %v386 = vld [vmem:[%s2 + $0x4] sm:$0xf]
    %v387 = vld [vmem:[%s7] sm:$0xf]
    %v388 = vld [vmem:[%s7 + $0x4] sm:$0xf]
    %v391 = vunpack.c.l.b16 %v385
    %v392 = vunpack.c.l.b16 %v386
    %v393 = vpack.c.b16 %v392, %v391
    %v396 = vunpack.c.l.b16 %v387
    %v397 = vunpack.c.l.b16 %v388
    %v398 = vpack.c.b16 %v397, %v396
    %vm400 = vcmask 130048
    %v402 = vsel %vm400, %v393, 0
    %404 = vmatprep.subr.bf16.mxu0 0
    %405 = vmatpush1.bf16.msra.mxu0 %v398
    %406 = vmatprep.subr.bf16.mxu0 0
    %407 = vmatpush1.bf16.msra.mxu0 0
    %408 = vmatprep.subr.bf16.mxu0 0
    %409 = vmatpush1.bf16.msra.mxu0 0
    %410 = vmatprep.subr.bf16.mxu0 0
    %411 = vmatpush1.bf16.msra.mxu0 0
    %412 = vmatprep.subr.bf16.mxu0 0
    %413 = vmatpush1.bf16.msra.mxu0 0
    %414 = vmatprep.subr.bf16.mxu0 0
    %415 = vmatpush1.bf16.msra.mxu0 0
    %416 = vmatprep.subr.bf16.mxu0 0
    %417 = vmatpush1.bf16.msra.mxu0 0
    %418 = vmatprep.subr.bf16.mxu0 0
    %419 = vmatpush1.bf16.msra.mxu0 0
    %420 = vmatprep.subr.bf16.mxu0 0
    %421 = vmatpush1.bf16.msra.mxu0 0
    %422 = vmatprep.subr.bf16.mxu0 0
    %423 = vmatpush1.bf16.msra.mxu0 0
    %424 = vmatprep.subr.bf16.mxu0 0
    %425 = vmatpush1.bf16.msra.mxu0 0
    %426 = vmatprep.subr.bf16.mxu0 0
    %427 = vmatpush1.bf16.msra.mxu0 0
    %428 = vmatprep.subr.bf16.mxu0 0
    %429 = vmatpush1.bf16.msra.mxu0 0
    %430 = vmatprep.subr.bf16.mxu0 0
    %431 = vmatpush1.bf16.msra.mxu0 0
    %432 = vmatprep.subr.bf16.mxu0 0
    %433 = vmatpush1.bf16.msra.mxu0 0
    %434 = vmatprep.subr.bf16.mxu0 0
    %435 = vmatpush1.bf16.msra.mxu0 0
    %436 = vmatprep.mubr.bf16.mxu0 0
    %437 = vmatmul.mubr.bf16.gmra.mrb[0].mxu0 %v402
    %v438 = vpop.f32.mrb[0].mxu0
    %v439 = vadd.f32 0.0, %v438
    %v440 = vpop.f32.mrb[0].mxu0
    %v441 = vpop.f32.mrb[0].mxu0
    %v442 = vadd.f32 0.0, %v441
    %v443 = vpop.f32.mrb[0].mxu0
    %444 = vdwg.mxu0
    %v445 = vld [vmem:[%s8] sm:$0x1]
    %v447 = vlaneseq
    %v448 = vshrl.u32 %v447, 7
    %v449 = vsub.s32 0, %v448
    %v450 = vrot.slane %v445, %v449
    %vm452 = vcmp.eq.f32.partialorder %v439, %v450
    %vm453 = vcmp.eq.f32.partialorder %v442, %v450
    %v454 = vsel %vm452, 1, 0
    %v455 = vsel %vm453, 1, 0
    %v456 = vcvt.s32.f32 %v454
    %v457 = vcvt.s32.f32 %v455
    %v458 = vpack.c.bf16 %v457, %v456
    %v459 = vld [vmem:[#allocation4] sm:$0xff]
    %v460 = vld [vmem:[#allocation4 + $0x8] sm:$0xff]
    %v461 = vld [vmem:[#allocation4 + $0x10] sm:$0xff]
    %v462 = vld [vmem:[#allocation4 + $0x18] sm:$0xff]
    %v463 = vld [vmem:[#allocation4 + $0x20] sm:$0xff]
    %v464 = vld [vmem:[#allocation4 + $0x28] sm:$0xff]
    %v465 = vld [vmem:[#allocation4 + $0x30] sm:$0xff]
    %v466 = vld [vmem:[#allocation4 + $0x38] sm:$0xff]
    %v467 = vld [vmem:[#allocation4 + $0x40] sm:$0xff]
    %v468 = vld [vmem:[#allocation4 + $0x48] sm:$0xff]
    %v469 = vld [vmem:[#allocation4 + $0x50] sm:$0xff]
    %v470 = vld [vmem:[#allocation4 + $0x58] sm:$0xff]
    %v471 = vld [vmem:[#allocation4 + $0x60] sm:$0xff]
    %v472 = vld [vmem:[#allocation4 + $0x68] sm:$0xff]
    %v473 = vld [vmem:[#allocation4 + $0x70] sm:$0xff]
    %v474 = vld [vmem:[#allocation4 + $0x78] sm:$0xff]
    %v491 = vunpack.c.l.b16 %v459
    %v492 = vunpack.c.h.b16 %v459
    %v493 = vunpack.c.l.b16 %v460
    %v494 = vunpack.c.h.b16 %v460
    %v495 = vunpack.c.l.b16 %v461
    %v496 = vunpack.c.h.b16 %v461
    %v497 = vunpack.c.l.b16 %v462
    %v498 = vunpack.c.h.b16 %v462
    %v499 = vunpack.c.l.b16 %v463
    %v500 = vunpack.c.h.b16 %v463
    %v501 = vunpack.c.l.b16 %v464
    %v502 = vunpack.c.h.b16 %v464
    %v503 = vunpack.c.l.b16 %v465
    %v504 = vunpack.c.h.b16 %v465
    %v505 = vunpack.c.l.b16 %v466
    %v506 = vunpack.c.h.b16 %v466
    %v507 = vunpack.c.l.b16 %v467
    %v508 = vunpack.c.h.b16 %v467
    %v509 = vunpack.c.l.b16 %v468
    %v510 = vunpack.c.h.b16 %v468
    %v511 = vunpack.c.l.b16 %v469
    %v512 = vunpack.c.h.b16 %v469
    %v513 = vunpack.c.l.b16 %v470
    %v514 = vunpack.c.h.b16 %v470
    %v515 = vunpack.c.l.b16 %v471
    %v516 = vunpack.c.h.b16 %v471
    %v517 = vunpack.c.l.b16 %v472
    %v518 = vunpack.c.h.b16 %v472
    %v519 = vunpack.c.l.b16 %v473
    %v520 = vunpack.c.h.b16 %v473
    %v521 = vunpack.c.l.b16 %v474
    %v522 = vunpack.c.h.b16 %v474
    %v523 = vpack.c.b16 %v493, %v491
    %v524 = vpack.c.b16 %v494, %v492
    %v525 = vpack.c.b16 %v497, %v495
    %v526 = vpack.c.b16 %v498, %v496
    %v527 = vpack.c.b16 %v501, %v499
    %v528 = vpack.c.b16 %v502, %v500
    %v529 = vpack.c.b16 %v505, %v503
    %v530 = vpack.c.b16 %v506, %v504
    %v531 = vpack.c.b16 %v509, %v507
    %v532 = vpack.c.b16 %v510, %v508
    %v533 = vpack.c.b16 %v513, %v511
    %v534 = vpack.c.b16 %v514, %v512
    %v535 = vpack.c.b16 %v517, %v515
    %v536 = vpack.c.b16 %v518, %v516
    %v537 = vpack.c.b16 %v521, %v519
    %v538 = vpack.c.b16 %v522, %v520
    %555 = vmatprep.subr.bf16.mxu0 %v524
    %556 = vmatpush1.bf16.msra.mxu0 %v523
    %557 = vmatprep.subr.bf16.mxu0 %v526
    %558 = vmatpush1.bf16.msra.mxu0 %v525
    %559 = vmatprep.subr.bf16.mxu0 %v528
    %560 = vmatpush1.bf16.msra.mxu0 %v527
    %561 = vmatprep.subr.bf16.mxu0 %v530
    %562 = vmatpush1.bf16.msra.mxu0 %v529
    %563 = vmatprep.subr.bf16.mxu0 %v532
    %564 = vmatpush1.bf16.msra.mxu0 %v531
    %565 = vmatprep.subr.bf16.mxu0 %v534
    %566 = vmatpush1.bf16.msra.mxu0 %v533
    %567 = vmatprep.subr.bf16.mxu0 %v536
    %568 = vmatpush1.bf16.msra.mxu0 %v535
    %569 = vmatprep.subr.bf16.mxu0 %v538
    %570 = vmatpush1.bf16.msra.mxu0 %v537
    %571 = vmatprep.subr.bf16.mxu0 0
    %572 = vmatpush1.bf16.msra.mxu0 0
    %573 = vmatprep.subr.bf16.mxu0 0
    %574 = vmatpush1.bf16.msra.mxu0 0
    %575 = vmatprep.subr.bf16.mxu0 0
    %576 = vmatpush1.bf16.msra.mxu0 0
    %577 = vmatprep.subr.bf16.mxu0 0
    %578 = vmatpush1.bf16.msra.mxu0 0
    %579 = vmatprep.subr.bf16.mxu0 0
    %580 = vmatpush1.bf16.msra.mxu0 0
    %581 = vmatprep.subr.bf16.mxu0 0
    %582 = vmatpush1.bf16.msra.mxu0 0
    %583 = vmatprep.subr.bf16.mxu0 0
    %584 = vmatpush1.bf16.msra.mxu0 0
    %585 = vmatprep.subr.bf16.mxu0 0
    %586 = vmatpush1.bf16.msra.mxu0 0
    %587 = vmatprep.mubr.bf16.mxu0 0
    %588 = vmatmul.mubr.bf16.gmra.mrb[0].mxu0 %v458
    %v589 = vpop.f32.mrb[0].mxu0
    %v590 = vadd.f32 0.0, %v589
    %v591 = vpop.f32.mrb[0].mxu0
    %v592 = vadd.f32 0.0, %v591
    %v593 = vpop.f32.mrb[0].mxu0
    %v594 = vadd.f32 0.0, %v593
    %v595 = vpop.f32.mrb[0].mxu0
    %v596 = vadd.f32 0.0, %v595
    %597 = vdwg.mxu0
    %v598 = vmax.f32 %v263, 0.0
    %v599 = vmax.f32 %v265, 0.0
    %v600 = vmax.f32 %v267, 0.0
    %v601 = vmax.f32 %v269, 0.0
    %v602 = vmax.f32 %v377, 0.0
    %v603 = vmax.f32 %v379, 0.0
    %v604 = vmax.f32 %v381, 0.0
    %v605 = vmax.f32 %v383, 0.0
    %v606 = vadd.f32 %v598, %v602
    %v607 = vadd.f32 %v599, %v603
    %v608 = vadd.f32 %v600, %v604
    %v609 = vadd.f32 %v601, %v605
    %v610 = vadd.f32 %v606, %v590
    %v611 = vadd.f32 %v607, %v592
    %v612 = vadd.f32 %v608, %v594
    %v613 = vadd.f32 %v609, %v596
    %v614 = vld [vmem:[%s14] sm:$0xff]
    %v615 = vld [vmem:[%s14 + $0x8] sm:$0xff]
    %v616 = vld [vmem:[%s14 + $0x10] sm:$0xff]
    %v617 = vld [vmem:[%s14 + $0x18] sm:$0xff]
    %v618 = vld [vmem:[%s14 + $0x20] sm:$0xff]
    %v619 = vld [vmem:[%s14 + $0x28] sm:$0xff]
    %v620 = vld [vmem:[%s14 + $0x30] sm:$0xff]
    %v621 = vld [vmem:[%s14 + $0x38] sm:$0xff]
    %v622 = vld [vmem:[%s14 + $0x40] sm:$0xff]
    %v623 = vld [vmem:[%s14 + $0x48] sm:$0xff]
    %v624 = vld [vmem:[%s14 + $0x50] sm:$0xff]
    %v625 = vld [vmem:[%s14 + $0x58] sm:$0xff]
    %v626 = vld [vmem:[%s14 + $0x60] sm:$0xff]
    %v627 = vld [vmem:[%s14 + $0x68] sm:$0xff]
    %v628 = vld [vmem:[%s14 + $0x70] sm:$0xff]
    %v629 = vld [vmem:[%s14 + $0x78] sm:$0xff]
    %v630 = vld [vmem:[%s14 + $0x80] sm:$0xff]
    %v631 = vld [vmem:[%s14 + $0x88] sm:$0xff]
    %v632 = vld [vmem:[%s14 + $0x90] sm:$0xff]
    %v633 = vld [vmem:[%s14 + $0x98] sm:$0xff]
    %v634 = vld [vmem:[%s14 + $0xa0] sm:$0xff]
    %v635 = vld [vmem:[%s14 + $0xa8] sm:$0xff]
    %v636 = vld [vmem:[%s14 + $0xb0] sm:$0xff]
    %v637 = vld [vmem:[%s14 + $0xb8] sm:$0xff]
    %v638 = vld [vmem:[%s14 + $0xc0] sm:$0xff]
    %v639 = vld [vmem:[%s14 + $0xc8] sm:$0xff]
    %v640 = vld [vmem:[%s14 + $0xd0] sm:$0xff]
    %v641 = vld [vmem:[%s14 + $0xd8] sm:$0xff]
    %v642 = vld [vmem:[%s14 + $0xe0] sm:$0xff]
    %v643 = vld [vmem:[%s14 + $0xe8] sm:$0xff]
    %v644 = vld [vmem:[%s14 + $0xf0] sm:$0xff]
    %v645 = vld [vmem:[%s14 + $0xf8] sm:$0xff]
    %v646 = vpack.c.bf16 %v612, %v610
    %v647 = vpack.c.bf16 %v613, %v611
    %v648 = vld [vmem:[#allocation6] sm:$0xff]
    %v649 = vld [vmem:[#allocation6 + $0x8] sm:$0xff]
    %v650 = vld [vmem:[#allocation6 + $0x10] sm:$0xff]
    %v651 = vld [vmem:[#allocation6 + $0x18] sm:$0xff]
    %v652 = vld [vmem:[#allocation6 + $0x20] sm:$0xff]
    %v653 = vld [vmem:[#allocation6 + $0x28] sm:$0xff]
    %v654 = vld [vmem:[#allocation6 + $0x30] sm:$0xff]
    %v655 = vld [vmem:[#allocation6 + $0x38] sm:$0xff]
    %v656 = vld [vmem:[#allocation6 + $0x40] sm:$0xff]
    %v657 = vld [vmem:[#allocation6 + $0x48] sm:$0xff]
    %v658 = vld [vmem:[#allocation6 + $0x50] sm:$0xff]
    %v659 = vld [vmem:[#allocation6 + $0x58] sm:$0xff]
    %v660 = vld [vmem:[#allocation6 + $0x60] sm:$0xff]
    %v661 = vld [vmem:[#allocation6 + $0x68] sm:$0xff]
    %v662 = vld [vmem:[#allocation6 + $0x70] sm:$0xff]
    %v663 = vld [vmem:[#allocation6 + $0x78] sm:$0xff]
    %v664 = vld [vmem:[#allocation6 + $0x80] sm:$0xff]
    %v665 = vld [vmem:[#allocation6 + $0x88] sm:$0xff]
    %v666 = vld [vmem:[#allocation6 + $0x90] sm:$0xff]
    %v667 = vld [vmem:[#allocation6 + $0x98] sm:$0xff]
    %v668 = vld [vmem:[#allocation6 + $0xa0] sm:$0xff]
    %v669 = vld [vmem:[#allocation6 + $0xa8] sm:$0xff]
    %v670 = vld [vmem:[#allocation6 + $0xb0] sm:$0xff]
    %v671 = vld [vmem:[#allocation6 + $0xb8] sm:$0xff]
    %v672 = vld [vmem:[#allocation6 + $0xc0] sm:$0xff]
    %v673 = vld [vmem:[#allocation6 + $0xc8] sm:$0xff]
    %v674 = vld [vmem:[#allocation6 + $0xd0] sm:$0xff]
    %v675 = vld [vmem:[#allocation6 + $0xd8] sm:$0xff]
    %v676 = vld [vmem:[#allocation6 + $0xe0] sm:$0xff]
    %v677 = vld [vmem:[#allocation6 + $0xe8] sm:$0xff]
    %v678 = vld [vmem:[#allocation6 + $0xf0] sm:$0xff]
    %v679 = vld [vmem:[#allocation6 + $0xf8] sm:$0xff]
    %v680 = vld [vmem:[%s11] ss:$4 sm:$0x3]
    %v682 = vlaneseq
    %v683 = vshrl.u32 %v682, 7
    %v684 = vsub.s32 0, %v683
    %v685 = vrot.slane %v680, %v684
    %v686 = vlaneseq
    %v687 = vshrl.u32 %v686, 7
    %v688 = vsub.s32 1, %v687
    %v689 = vrot.slane %v680, %v688
    %v724 = vunpack.c.l.b16 %v648
    %v725 = vunpack.c.h.b16 %v648
    %v726 = vunpack.c.l.b16 %v649
    %v727 = vunpack.c.h.b16 %v649
    %v728 = vunpack.c.l.b16 %v650
    %v729 = vunpack.c.h.b16 %v650
    %v730 = vunpack.c.l.b16 %v651
    %v731 = vunpack.c.h.b16 %v651
    %v732 = vunpack.c.l.b16 %v652
    %v733 = vunpack.c.h.b16 %v652
    %v734 = vunpack.c.l.b16 %v653
    %v735 = vunpack.c.h.b16 %v653
    %v736 = vunpack.c.l.b16 %v654
    %v737 = vunpack.c.h.b16 %v654
    %v738 = vunpack.c.l.b16 %v655
    %v739 = vunpack.c.h.b16 %v655
    %v740 = vunpack.c.l.b16 %v656
    %v741 = vunpack.c.h.b16 %v656
    %v742 = vunpack.c.l.b16 %v657
    %v743 = vunpack.c.h.b16 %v657
    %v744 = vunpack.c.l.b16 %v658
    %v745 = vunpack.c.h.b16 %v658
    %v746 = vunpack.c.l.b16 %v659
    %v747 = vunpack.c.h.b16 %v659
    %v748 = vunpack.c.l.b16 %v660
    %v749 = vunpack.c.h.b16 %v660
    %v750 = vunpack.c.l.b16 %v661
    %v751 = vunpack.c.h.b16 %v661
    %v752 = vunpack.c.l.b16 %v662
    %v753 = vunpack.c.h.b16 %v662
    %v754 = vunpack.c.l.b16 %v663
    %v755 = vunpack.c.h.b16 %v663
    %v756 = vunpack.c.l.b16 %v664
    %v757 = vunpack.c.h.b16 %v664
    %v758 = vunpack.c.l.b16 %v665
    %v759 = vunpack.c.h.b16 %v665
    %v760 = vunpack.c.l.b16 %v666
    %v761 = vunpack.c.h.b16 %v666
    %v762 = vunpack.c.l.b16 %v667
    %v763 = vunpack.c.h.b16 %v667
    %v764 = vunpack.c.l.b16 %v668
    %v765 = vunpack.c.h.b16 %v668
    %v766 = vunpack.c.l.b16 %v669
    %v767 = vunpack.c.h.b16 %v669
    %v768 = vunpack.c.l.b16 %v670
    %v769 = vunpack.c.h.b16 %v670
    %v770 = vunpack.c.l.b16 %v671
    %v771 = vunpack.c.h.b16 %v671
    %v772 = vunpack.c.l.b16 %v672
    %v773 = vunpack.c.h.b16 %v672
    %v774 = vunpack.c.l.b16 %v673
    %v775 = vunpack.c.h.b16 %v673
    %v776 = vunpack.c.l.b16 %v674
    %v777 = vunpack.c.h.b16 %v674
    %v778 = vunpack.c.l.b16 %v675
    %v779 = vunpack.c.h.b16 %v675
    %v780 = vunpack.c.l.b16 %v676
    %v781 = vunpack.c.h.b16 %v676
    %v782 = vunpack.c.l.b16 %v677
    %v783 = vunpack.c.h.b16 %v677
    %v784 = vunpack.c.l.b16 %v678
    %v785 = vunpack.c.h.b16 %v678
    %v786 = vunpack.c.l.b16 %v679
    %v787 = vunpack.c.h.b16 %v679
    %v788 = vpack.c.b16 %v726, %v724
    %v789 = vpack.c.b16 %v727, %v725
    %v790 = vpack.c.b16 %v730, %v728
    %v791 = vpack.c.b16 %v731, %v729
    %v792 = vpack.c.b16 %v734, %v732
    %v793 = vpack.c.b16 %v735, %v733
    %v794 = vpack.c.b16 %v738, %v736
    %v795 = vpack.c.b16 %v739, %v737
    %v796 = vpack.c.b16 %v742, %v740
    %v797 = vpack.c.b16 %v743, %v741
    %v798 = vpack.c.b16 %v746, %v744
    %v799 = vpack.c.b16 %v747, %v745
    %v800 = vpack.c.b16 %v750, %v748
    %v801 = vpack.c.b16 %v751, %v749
    %v802 = vpack.c.b16 %v754, %v752
    %v803 = vpack.c.b16 %v755, %v753
    %v804 = vpack.c.b16 %v758, %v756
    %v805 = vpack.c.b16 %v759, %v757
    %v806 = vpack.c.b16 %v762, %v760
    %v807 = vpack.c.b16 %v763, %v761
    %v808 = vpack.c.b16 %v766, %v764
    %v809 = vpack.c.b16 %v767, %v765
    %v810 = vpack.c.b16 %v770, %v768
    %v811 = vpack.c.b16 %v771, %v769
    %v812 = vpack.c.b16 %v774, %v772
    %v813 = vpack.c.b16 %v775, %v773
    %v814 = vpack.c.b16 %v778, %v776
    %v815 = vpack.c.b16 %v779, %v777
    %v816 = vpack.c.b16 %v782, %v780
    %v817 = vpack.c.b16 %v783, %v781
    %v818 = vpack.c.b16 %v786, %v784
    %v819 = vpack.c.b16 %v787, %v785
    %852 = vmatprep.subr.bf16.mxu0 %v789
    %853 = vmatpush1.bf16.msra.mxu0 %v788
    %854 = vmatprep.subr.bf16.mxu0 %v791
    %855 = vmatpush1.bf16.msra.mxu0 %v790
    %856 = vmatprep.subr.bf16.mxu0 %v793
    %857 = vmatpush1.bf16.msra.mxu0 %v792
    %858 = vmatprep.subr.bf16.mxu0 %v795
    %859 = vmatpush1.bf16.msra.mxu0 %v794
    %860 = vmatprep.subr.bf16.mxu0 %v797
    %861 = vmatpush1.bf16.msra.mxu0 %v796
    %862 = vmatprep.subr.bf16.mxu0 %v799
    %863 = vmatpush1.bf16.msra.mxu0 %v798
    %864 = vmatprep.subr.bf16.mxu0 %v801
    %865 = vmatpush1.bf16.msra.mxu0 %v800
    %866 = vmatprep.subr.bf16.mxu0 %v803
    %867 = vmatpush1.bf16.msra.mxu0 %v802
    %868 = vmatprep.subr.bf16.mxu0 %v805
    %869 = vmatpush1.bf16.msra.mxu0 %v804
    %870 = vmatprep.subr.bf16.mxu0 %v807
    %871 = vmatpush1.bf16.msra.mxu0 %v806
    %872 = vmatprep.subr.bf16.mxu0 %v809
    %873 = vmatpush1.bf16.msra.mxu0 %v808
    %874 = vmatprep.subr.bf16.mxu0 %v811
    %875 = vmatpush1.bf16.msra.mxu0 %v810
    %876 = vmatprep.subr.bf16.mxu0 %v813
    %877 = vmatpush1.bf16.msra.mxu0 %v812
    %878 = vmatprep.subr.bf16.mxu0 %v815
    %879 = vmatpush1.bf16.msra.mxu0 %v814
    %880 = vmatprep.subr.bf16.mxu0 %v817
    %881 = vmatpush1.bf16.msra.mxu0 %v816
    %882 = vmatprep.subr.bf16.mxu0 %v819
    %883 = vmatpush1.bf16.msra.mxu0 %v818
    %884 = vmatprep.mubr.bf16.mxu0 %v647
    %885 = vmatmul.mubr.bf16.gmra.mrb[0].mxu0 %v646
    %v886 = vpop.f32.mrb[0].mxu0
    %v887 = vadd.f32 %v685, %v886
    %v888 = vpop.f32.mrb[0].mxu0
    %v889 = vadd.f32 %v689, %v888
    %v890 = vpop.f32.mrb[0].mxu0
    %v891 = vadd.f32 %v685, %v890
    %v892 = vpop.f32.mrb[0].mxu0
    %v893 = vadd.f32 %v689, %v892
    %894 = vdwg.mxu0
    %v895 = vpack.c.bf16 %v891, %v887
    %v896 = vpack.c.bf16 %v893, %v889
    %v929 = vunpack.c.l.b16 %v614
    %v930 = vunpack.c.h.b16 %v614
    %v931 = vunpack.c.l.b16 %v615
    %v932 = vunpack.c.h.b16 %v615
    %v933 = vunpack.c.l.b16 %v616
    %v934 = vunpack.c.h.b16 %v616
    %v935 = vunpack.c.l.b16 %v617
    %v936 = vunpack.c.h.b16 %v617
    %v937 = vunpack.c.l.b16 %v618
    %v938 = vunpack.c.h.b16 %v618
    %v939 = vunpack.c.l.b16 %v619
    %v940 = vunpack.c.h.b16 %v619
    %v941 = vunpack.c.l.b16 %v620
    %v942 = vunpack.c.h.b16 %v620
    %v943 = vunpack.c.l.b16 %v621
    %v944 = vunpack.c.h.b16 %v621
    %v945 = vunpack.c.l.b16 %v622
    %v946 = vunpack.c.h.b16 %v622
    %v947 = vunpack.c.l.b16 %v623
    %v948 = vunpack.c.h.b16 %v623
    %v949 = vunpack.c.l.b16 %v624
    %v950 = vunpack.c.h.b16 %v624
    %v951 = vunpack.c.l.b16 %v625
    %v952 = vunpack.c.h.b16 %v625
    %v953 = vunpack.c.l.b16 %v626
    %v954 = vunpack.c.h.b16 %v626
    %v955 = vunpack.c.l.b16 %v627
    %v956 = vunpack.c.h.b16 %v627
    %v957 = vunpack.c.l.b16 %v628
    %v958 = vunpack.c.h.b16 %v628
    %v959 = vunpack.c.l.b16 %v629
    %v960 = vunpack.c.h.b16 %v629
    %v961 = vunpack.c.l.b16 %v630
    %v962 = vunpack.c.h.b16 %v630
    %v963 = vunpack.c.l.b16 %v631
    %v964 = vunpack.c.h.b16 %v631
    %v965 = vunpack.c.l.b16 %v632
    %v966 = vunpack.c.h.b16 %v632
    %v967 = vunpack.c.l.b16 %v633
    %v968 = vunpack.c.h.b16 %v633
    %v969 = vunpack.c.l.b16 %v634
    %v970 = vunpack.c.h.b16 %v634
    %v971 = vunpack.c.l.b16 %v635
    %v972 = vunpack.c.h.b16 %v635
    %v973 = vunpack.c.l.b16 %v636
    %v974 = vunpack.c.h.b16 %v636
    %v975 = vunpack.c.l.b16 %v637
    %v976 = vunpack.c.h.b16 %v637
    %v977 = vunpack.c.l.b16 %v638
    %v978 = vunpack.c.h.b16 %v638
    %v979 = vunpack.c.l.b16 %v639
    %v980 = vunpack.c.h.b16 %v639
    %v981 = vunpack.c.l.b16 %v640
    %v982 = vunpack.c.h.b16 %v640
    %v983 = vunpack.c.l.b16 %v641
    %v984 = vunpack.c.h.b16 %v641
    %v985 = vunpack.c.l.b16 %v642
    %v986 = vunpack.c.h.b16 %v642
    %v987 = vunpack.c.l.b16 %v643
    %v988 = vunpack.c.h.b16 %v643
    %v989 = vunpack.c.l.b16 %v644
    %v990 = vunpack.c.h.b16 %v644
    %v991 = vunpack.c.l.b16 %v645
    %v992 = vunpack.c.h.b16 %v645
    %v993 = vpack.c.b16 %v931, %v929
    %v994 = vpack.c.b16 %v932, %v930
    %v995 = vpack.c.b16 %v935, %v933
    %v996 = vpack.c.b16 %v936, %v934
    %v997 = vpack.c.b16 %v939, %v937
    %v998 = vpack.c.b16 %v940, %v938
    %v999 = vpack.c.b16 %v943, %v941
    %v1000 = vpack.c.b16 %v944, %v942
    %v1001 = vpack.c.b16 %v947, %v945
    %v1002 = vpack.c.b16 %v948, %v946
    %v1003 = vpack.c.b16 %v951, %v949
    %v1004 = vpack.c.b16 %v952, %v950
    %v1005 = vpack.c.b16 %v955, %v953
    %v1006 = vpack.c.b16 %v956, %v954
    %v1007 = vpack.c.b16 %v959, %v957
    %v1008 = vpack.c.b16 %v960, %v958
    %v1009 = vpack.c.b16 %v963, %v961
    %v1010 = vpack.c.b16 %v964, %v962
    %v1011 = vpack.c.b16 %v967, %v965
    %v1012 = vpack.c.b16 %v968, %v966
    %v1013 = vpack.c.b16 %v971, %v969
    %v1014 = vpack.c.b16 %v972, %v970
    %v1015 = vpack.c.b16 %v975, %v973
    %v1016 = vpack.c.b16 %v976, %v974
    %v1017 = vpack.c.b16 %v979, %v977
    %v1018 = vpack.c.b16 %v980, %v978
    %v1019 = vpack.c.b16 %v983, %v981
    %v1020 = vpack.c.b16 %v984, %v982
    %v1021 = vpack.c.b16 %v987, %v985
    %v1022 = vpack.c.b16 %v988, %v986
    %v1023 = vpack.c.b16 %v991, %v989
    %v1024 = vpack.c.b16 %v992, %v990
    %1057 = vmatprep.subr.bf16.mxu0 %v994
    %1058 = vmatpush1.bf16.msra.mxu0 %v993
    %1059 = vmatprep.subr.bf16.mxu0 %v996
    %1060 = vmatpush1.bf16.msra.mxu0 %v995
    %1061 = vmatprep.subr.bf16.mxu0 %v998
    %1062 = vmatpush1.bf16.msra.mxu0 %v997
    %1063 = vmatprep.subr.bf16.mxu0 %v1000
    %1064 = vmatpush1.bf16.msra.mxu0 %v999
    %1065 = vmatprep.subr.bf16.mxu0 %v1002
    %1066 = vmatpush1.bf16.msra.mxu0 %v1001
    %1067 = vmatprep.subr.bf16.mxu0 %v1004
    %1068 = vmatpush1.bf16.msra.mxu0 %v1003
    %1069 = vmatprep.subr.bf16.mxu0 %v1006
    %1070 = vmatpush1.bf16.msra.mxu0 %v1005
    %1071 = vmatprep.subr.bf16.mxu0 %v1008
    %1072 = vmatpush1.bf16.msra.mxu0 %v1007
    %1073 = vmatprep.subr.bf16.mxu0 %v1010
    %1074 = vmatpush1.bf16.msra.mxu0 %v1009
    %1075 = vmatprep.subr.bf16.mxu0 %v1012
    %1076 = vmatpush1.bf16.msra.mxu0 %v1011
    %1077 = vmatprep.subr.bf16.mxu0 %v1014
    %1078 = vmatpush1.bf16.msra.mxu0 %v1013
    %1079 = vmatprep.subr.bf16.mxu0 %v1016
    %1080 = vmatpush1.bf16.msra.mxu0 %v1015
    %1081 = vmatprep.subr.bf16.mxu0 %v1018
    %1082 = vmatpush1.bf16.msra.mxu0 %v1017
    %1083 = vmatprep.subr.bf16.mxu0 %v1020
    %1084 = vmatpush1.bf16.msra.mxu0 %v1019
    %1085 = vmatprep.subr.bf16.mxu0 %v1022
    %1086 = vmatpush1.bf16.msra.mxu0 %v1021
    %1087 = vmatprep.subr.bf16.mxu0 %v1024
    %1088 = vmatpush1.bf16.msra.mxu0 %v1023
    %1089 = vmatprep.mubr.bf16.mxu0 %v896
    %1090 = vmatmul.mubr.bf16.gmra.mrb[0].mxu0 %v895
    %v1091 = vpop.f32.mrb[0].mxu0
    %v1092 = vadd.f32 0.0, %v1091
    %v1093 = vpop.f32.mrb[0].mxu0
    %v1094 = vadd.f32 0.0, %v1093
    %v1095 = vpop.f32.mrb[0].mxu0
    %v1096 = vadd.f32 0.0, %v1095
    %v1097 = vpop.f32.mrb[0].mxu0
    %v1098 = vadd.f32 0.0, %v1097
    %1099 = vdwg.mxu0
    %v1100 = vsub.f32 %v887, %v1092
    %v1101 = vsub.f32 %v889, %v1094
    %v1102 = vsub.f32 %v891, %v1096
    %v1103 = vsub.f32 %v893, %v1098
    %v1104 = vmul.f32 %v1100, %v1100
    %v1105 = vmul.f32 %v1101, %v1101
    %v1106 = vmul.f32 %v1102, %v1102
    %v1107 = vmul.f32 %v1103, %v1103
    %v1108 = vpack.c.bf16 %v1106, %v1104
    %v1109 = vpack.c.bf16 %v1107, %v1105
    %1110 = vmatprep.subr.bf16.mxu0 %v994
    %1111 = vmatpush1.bf16.msra.mxu0 %v993
    %1112 = vmatprep.subr.bf16.mxu0 %v996
    %1113 = vmatpush1.bf16.msra.mxu0 %v995
    %1114 = vmatprep.subr.bf16.mxu0 %v998
    %1115 = vmatpush1.bf16.msra.mxu0 %v997
    %1116 = vmatprep.subr.bf16.mxu0 %v1000
    %1117 = vmatpush1.bf16.msra.mxu0 %v999
    %1118 = vmatprep.subr.bf16.mxu0 %v1002
    %1119 = vmatpush1.bf16.msra.mxu0 %v1001
    %1120 = vmatprep.subr.bf16.mxu0 %v1004
    %1121 = vmatpush1.bf16.msra.mxu0 %v1003
    %1122 = vmatprep.subr.bf16.mxu0 %v1006
    %1123 = vmatpush1.bf16.msra.mxu0 %v1005
    %1124 = vmatprep.subr.bf16.mxu0 %v1008
    %1125 = vmatpush1.bf16.msra.mxu0 %v1007
    %1126 = vmatprep.subr.bf16.mxu0 %v1010
    %1127 = vmatpush1.bf16.msra.mxu0 %v1009
    %1128 = vmatprep.subr.bf16.mxu0 %v1012
    %1129 = vmatpush1.bf16.msra.mxu0 %v1011
    %1130 = vmatprep.subr.bf16.mxu0 %v1014
    %1131 = vmatpush1.bf16.msra.mxu0 %v1013
    %1132 = vmatprep.subr.bf16.mxu0 %v1016
    %1133 = vmatpush1.bf16.msra.mxu0 %v1015
    %1134 = vmatprep.subr.bf16.mxu0 %v1018
    %1135 = vmatpush1.bf16.msra.mxu0 %v1017
    %1136 = vmatprep.subr.bf16.mxu0 %v1020
    %1137 = vmatpush1.bf16.msra.mxu0 %v1019
    %1138 = vmatprep.subr.bf16.mxu0 %v1022
    %1139 = vmatpush1.bf16.msra.mxu0 %v1021
    %1140 = vmatprep.subr.bf16.mxu0 %v1024
    %1141 = vmatpush1.bf16.msra.mxu0 %v1023
    %1142 = vmatprep.mubr.bf16.mxu0 %v1109
    %1143 = vmatmul.mubr.bf16.gmra.mrb[0].mxu0 %v1108
    %v1144 = vpop.f32.mrb[0].mxu0
    %v1145 = vadd.f32 1e-05, %v1144
    %v1146 = vpop.f32.mrb[0].mxu0
    %v1147 = vadd.f32 1e-05, %v1146
    %v1148 = vpop.f32.mrb[0].mxu0
    %v1149 = vadd.f32 1e-05, %v1148
    %v1150 = vpop.f32.mrb[0].mxu0
    %v1151 = vadd.f32 1e-05, %v1150
    %1152 = vdwg.mxu0
    %v1153 = vrsqrt.pop %v1145
    %v1154 = vrsqrt.pop %v1147
    %v1155 = vrsqrt.pop %v1149
    %v1156 = vrsqrt.pop %v1151
    %v1157 = vmul.f32 %v1100, %v1153
    %v1158 = vmul.f32 %v1101, %v1154
    %v1159 = vmul.f32 %v1102, %v1155
    %v1160 = vmul.f32 %v1103, %v1156
    %v1161 = vld [vmem:[%s12] ss:$4 sm:$0x3]
    %v1163 = vlaneseq
    %v1164 = vshrl.u32 %v1163, 7
    %v1165 = vsub.s32 0, %v1164
    %v1166 = vrot.slane %v1161, %v1165
    %v1167 = vlaneseq
    %v1168 = vshrl.u32 %v1167, 7
    %v1169 = vsub.s32 1, %v1168
    %v1170 = vrot.slane %v1161, %v1169
    %v1173 = vmul.f32 %v1157, %v1166
    %v1174 = vmul.f32 %v1158, %v1170
    %v1175 = vmul.f32 %v1159, %v1166
    %v1176 = vmul.f32 %v1160, %v1170
    %v1177 = vld [vmem:[%s13] ss:$4 sm:$0x3]
    %v1179 = vlaneseq
    %v1180 = vshrl.u32 %v1179, 7
    %v1181 = vsub.s32 0, %v1180
    %v1182 = vrot.slane %v1177, %v1181
    %v1183 = vlaneseq
    %v1184 = vshrl.u32 %v1183, 7
    %v1185 = vsub.s32 1, %v1184
    %v1186 = vrot.slane %v1177, %v1185
    %v1189 = vadd.f32 %v1173, %v1182
    %v1190 = vadd.f32 %v1174, %v1186
    %v1191 = vadd.f32 %v1175, %v1182
    %v1192 = vadd.f32 %v1176, %v1186
    %v1193 = vmax.f32 %v1189, 0.0
    %v1194 = vmax.f32 %v1190, 0.0
    %v1195 = vmax.f32 %v1191, 0.0
    %v1196 = vmax.f32 %v1192, 0.0
    %v1197 = vadd.f32 %v610, %v1193
    %v1198 = vadd.f32 %v611, %v1194
    %v1199 = vadd.f32 %v612, %v1195
    %v1200 = vadd.f32 %v613, %v1196
    %v1201 = vpack.c.bf16 %v1199, %v1197
    %v1202 = vpack.c.bf16 %v1200, %v1198
    %s1203 = scalar_lea.vmem [#allocation6], 256
    %v1204 = vld [vmem:[%s1203] sm:$0xff]
    %v1205 = vld [vmem:[%s1203 + $0x8] sm:$0xff]
    %v1206 = vld [vmem:[%s1203 + $0x10] sm:$0xff]
    %v1207 = vld [vmem:[%s1203 + $0x18] sm:$0xff]
    %v1208 = vld [vmem:[%s1203 + $0x20] sm:$0xff]
    %v1209 = vld [vmem:[%s1203 + $0x28] sm:$0xff]
    %v1210 = vld [vmem:[%s1203 + $0x30] sm:$0xff]
    %v1211 = vld [vmem:[%s1203 + $0x38] sm:$0xff]
    %v1212 = vld [vmem:[%s1203 + $0x40] sm:$0xff]
    %v1213 = vld [vmem:[%s1203 + $0x48] sm:$0xff]
    %v1214 = vld [vmem:[%s1203 + $0x50] sm:$0xff]
    %v1215 = vld [vmem:[%s1203 + $0x58] sm:$0xff]
    %v1216 = vld [vmem:[%s1203 + $0x60] sm:$0xff]
    %v1217 = vld [vmem:[%s1203 + $0x68] sm:$0xff]
    %v1218 = vld [vmem:[%s1203 + $0x70] sm:$0xff]
    %v1219 = vld [vmem:[%s1203 + $0x78] sm:$0xff]
    %v1220 = vld [vmem:[%s1203 + $0x80] sm:$0xff]
    %v1221 = vld [vmem:[%s1203 + $0x88] sm:$0xff]
    %v1222 = vld [vmem:[%s1203 + $0x90] sm:$0xff]
    %v1223 = vld [vmem:[%s1203 + $0x98] sm:$0xff]
    %v1224 = vld [vmem:[%s1203 + $0xa0] sm:$0xff]
    %v1225 = vld [vmem:[%s1203 + $0xa8] sm:$0xff]
    %v1226 = vld [vmem:[%s1203 + $0xb0] sm:$0xff]
    %v1227 = vld [vmem:[%s1203 + $0xb8] sm:$0xff]
    %v1228 = vld [vmem:[%s1203 + $0xc0] sm:$0xff]
    %v1229 = vld [vmem:[%s1203 + $0xc8] sm:$0xff]
    %v1230 = vld [vmem:[%s1203 + $0xd0] sm:$0xff]
    %v1231 = vld [vmem:[%s1203 + $0xd8] sm:$0xff]
    %v1232 = vld [vmem:[%s1203 + $0xe0] sm:$0xff]
    %v1233 = vld [vmem:[%s1203 + $0xe8] sm:$0xff]
    %v1234 = vld [vmem:[%s1203 + $0xf0] sm:$0xff]
    %v1235 = vld [vmem:[%s1203 + $0xf8] sm:$0xff]
    %s1236 = scalar_lea.vmem %s11, 1
    %v1237 = vld [vmem:[%s1236] ss:$4 sm:$0x3]
    %v1239 = vlaneseq
    %v1240 = vshrl.u32 %v1239, 7
    %v1241 = vsub.s32 0, %v1240
    %v1242 = vrot.slane %v1237, %v1241
    %v1243 = vlaneseq
    %v1244 = vshrl.u32 %v1243, 7
    %v1245 = vsub.s32 1, %v1244
    %v1246 = vrot.slane %v1237, %v1245
    %v1281 = vunpack.c.l.b16 %v1204
    %v1282 = vunpack.c.h.b16 %v1204
    %v1283 = vunpack.c.l.b16 %v1205
    %v1284 = vunpack.c.h.b16 %v1205
    %v1285 = vunpack.c.l.b16 %v1206
    %v1286 = vunpack.c.h.b16 %v1206
    %v1287 = vunpack.c.l.b16 %v1207
    %v1288 = vunpack.c.h.b16 %v1207
    %v1289 = vunpack.c.l.b16 %v1208
    %v1290 = vunpack.c.h.b16 %v1208
    %v1291 = vunpack.c.l.b16 %v1209
    %v1292 = vunpack.c.h.b16 %v1209
    %v1293 = vunpack.c.l.b16 %v1210
    %v1294 = vunpack.c.h.b16 %v1210
    %v1295 = vunpack.c.l.b16 %v1211
    %v1296 = vunpack.c.h.b16 %v1211
    %v1297 = vunpack.c.l.b16 %v1212
    %v1298 = vunpack.c.h.b16 %v1212
    %v1299 = vunpack.c.l.b16 %v1213
    %v1300 = vunpack.c.h.b16 %v1213
    %v1301 = vunpack.c.l.b16 %v1214
    %v1302 = vunpack.c.h.b16 %v1214
    %v1303 = vunpack.c.l.b16 %v1215
    %v1304 = vunpack.c.h.b16 %v1215
    %v1305 = vunpack.c.l.b16 %v1216
    %v1306 = vunpack.c.h.b16 %v1216
    %v1307 = vunpack.c.l.b16 %v1217
    %v1308 = vunpack.c.h.b16 %v1217
    %v1309 = vunpack.c.l.b16 %v1218
    %v1310 = vunpack.c.h.b16 %v1218
    %v1311 = vunpack.c.l.b16 %v1219
    %v1312 = vunpack.c.h.b16 %v1219
    %v1313 = vunpack.c.l.b16 %v1220
    %v1314 = vunpack.c.h.b16 %v1220
    %v1315 = vunpack.c.l.b16 %v1221
    %v1316 = vunpack.c.h.b16 %v1221
    %v1317 = vunpack.c.l.b16 %v1222
    %v1318 = vunpack.c.h.b16 %v1222
    %v1319 = vunpack.c.l.b16 %v1223
    %v1320 = vunpack.c.h.b16 %v1223
    %v1321 = vunpack.c.l.b16 %v1224
    %v1322 = vunpack.c.h.b16 %v1224
    %v1323 = vunpack.c.l.b16 %v1225
    %v1324 = vunpack.c.h.b16 %v1225
    %v1325 = vunpack.c.l.b16 %v1226
    %v1326 = vunpack.c.h.b16 %v1226
    %v1327 = vunpack.c.l.b16 %v1227
    %v1328 = vunpack.c.h.b16 %v1227
    %v1329 = vunpack.c.l.b16 %v1228
    %v1330 = vunpack.c.h.b16 %v1228
    %v1331 = vunpack.c.l.b16 %v1229
    %v1332 = vunpack.c.h.b16 %v1229
    %v1333 = vunpack.c.l.b16 %v1230
    %v1334 = vunpack.c.h.b16 %v1230
    %v1335 = vunpack.c.l.b16 %v1231
    %v1336 = vunpack.c.h.b16 %v1231
    %v1337 = vunpack.c.l.b16 %v1232
    %v1338 = vunpack.c.h.b16 %v1232
    %v1339 = vunpack.c.l.b16 %v1233
    %v1340 = vunpack.c.h.b16 %v1233
    %v1341 = vunpack.c.l.b16 %v1234
    %v1342 = vunpack.c.h.b16 %v1234
    %v1343 = vunpack.c.l.b16 %v1235
    %v1344 = vunpack.c.h.b16 %v1235
    %v1345 = vpack.c.b16 %v1283, %v1281
    %v1346 = vpack.c.b16 %v1284, %v1282
    %v1347 = vpack.c.b16 %v1287, %v1285
    %v1348 = vpack.c.b16 %v1288, %v1286
    %v1349 = vpack.c.b16 %v1291, %v1289
    %v1350 = vpack.c.b16 %v1292, %v1290
    %v1351 = vpack.c.b16 %v1295, %v1293
    %v1352 = vpack.c.b16 %v1296, %v1294
    %v1353 = vpack.c.b16 %v1299, %v1297
    %v1354 = vpack.c.b16 %v1300, %v1298
    %v1355 = vpack.c.b16 %v1303, %v1301
    %v1356 = vpack.c.b16 %v1304, %v1302
    %v1357 = vpack.c.b16 %v1307, %v1305
    %v1358 = vpack.c.b16 %v1308, %v1306
    %v1359 = vpack.c.b16 %v1311, %v1309
    %v1360 = vpack.c.b16 %v1312, %v1310
    %v1361 = vpack.c.b16 %v1315, %v1313
    %v1362 = vpack.c.b16 %v1316, %v1314
    %v1363 = vpack.c.b16 %v1319, %v1317
    %v1364 = vpack.c.b16 %v1320, %v1318
    %v1365 = vpack.c.b16 %v1323, %v1321
    %v1366 = vpack.c.b16 %v1324, %v1322
    %v1367 = vpack.c.b16 %v1327, %v1325
    %v1368 = vpack.c.b16 %v1328, %v1326
    %v1369 = vpack.c.b16 %v1331, %v1329
    %v1370 = vpack.c.b16 %v1332, %v1330
    %v1371 = vpack.c.b16 %v1335, %v1333
    %v1372 = vpack.c.b16 %v1336, %v1334
    %v1373 = vpack.c.b16 %v1339, %v1337
    %v1374 = vpack.c.b16 %v1340, %v1338
    %v1375 = vpack.c.b16 %v1343, %v1341
    %v1376 = vpack.c.b16 %v1344, %v1342
    %1409 = vmatprep.subr.bf16.mxu0 %v1346
    %1410 = vmatpush1.bf16.msra.mxu0 %v1345
    %1411 = vmatprep.subr.bf16.mxu0 %v1348
    %1412 = vmatpush1.bf16.msra.mxu0 %v1347
    %1413 = vmatprep.subr.bf16.mxu0 %v1350
    %1414 = vmatpush1.bf16.msra.mxu0 %v1349
    %1415 = vmatprep.subr.bf16.mxu0 %v1352
    %1416 = vmatpush1.bf16.msra.mxu0 %v1351
    %1417 = vmatprep.subr.bf16.mxu0 %v1354
    %1418 = vmatpush1.bf16.msra.mxu0 %v1353
    %1419 = vmatprep.subr.bf16.mxu0 %v1356
    %1420 = vmatpush1.bf16.msra.mxu0 %v1355
    %1421 = vmatprep.subr.bf16.mxu0 %v1358
    %1422 = vmatpush1.bf16.msra.mxu0 %v1357
    %1423 = vmatprep.subr.bf16.mxu0 %v1360
    %1424 = vmatpush1.bf16.msra.mxu0 %v1359
    %1425 = vmatprep.subr.bf16.mxu0 %v1362
    %1426 = vmatpush1.bf16.msra.mxu0 %v1361
    %1427 = vmatprep.subr.bf16.mxu0 %v1364
    %1428 = vmatpush1.bf16.msra.mxu0 %v1363
    %1429 = vmatprep.subr.bf16.mxu0 %v1366
    %1430 = vmatpush1.bf16.msra.mxu0 %v1365
    %1431 = vmatprep.subr.bf16.mxu0 %v1368
    %1432 = vmatpush1.bf16.msra.mxu0 %v1367
    %1433 = vmatprep.subr.bf16.mxu0 %v1370
    %1434 = vmatpush1.bf16.msra.mxu0 %v1369
    %1435 = vmatprep.subr.bf16.mxu0 %v1372
    %1436 = vmatpush1.bf16.msra.mxu0 %v1371
    %1437 = vmatprep.subr.bf16.mxu0 %v1374
    %1438 = vmatpush1.bf16.msra.mxu0 %v1373
    %1439 = vmatprep.subr.bf16.mxu0 %v1376
    %1440 = vmatpush1.bf16.msra.mxu0 %v1375
    %1441 = vmatprep.mubr.bf16.mxu0 %v1202
    %1442 = vmatmul.mubr.bf16.gmra.mrb[0].mxu0 %v1201
    %v1443 = vpop.f32.mrb[0].mxu0
    %v1444 = vadd.f32 %v1242, %v1443
    %v1445 = vpop.f32.mrb[0].mxu0
    %v1446 = vadd.f32 %v1246, %v1445
    %v1447 = vpop.f32.mrb[0].mxu0
    %v1448 = vadd.f32 %v1242, %v1447
    %v1449 = vpop.f32.mrb[0].mxu0
    %v1450 = vadd.f32 %v1246, %v1449
    %1451 = vdwg.mxu0
    %v1452 = vpack.c.bf16 %v1448, %v1444
    %v1453 = vpack.c.bf16 %v1450, %v1446
    %1454 = vmatprep.subr.bf16.mxu0 %v994
    %1455 = vmatpush1.bf16.msra.mxu0 %v993
    %1456 = vmatprep.subr.bf16.mxu0 %v996
    %1457 = vmatpush1.bf16.msra.mxu0 %v995
    %1458 = vmatprep.subr.bf16.mxu0 %v998
    %1459 = vmatpush1.bf16.msra.mxu0 %v997
    %1460 = vmatprep.subr.bf16.mxu0 %v1000
    %1461 = vmatpush1.bf16.msra.mxu0 %v999
    %1462 = vmatprep.subr.bf16.mxu0 %v1002
    %1463 = vmatpush1.bf16.msra.mxu0 %v1001
    %1464 = vmatprep.subr.bf16.mxu0 %v1004
    %1465 = vmatpush1.bf16.msra.mxu0 %v1003
    %1466 = vmatprep.subr.bf16.mxu0 %v1006
    %1467 = vmatpush1.bf16.msra.mxu0 %v1005
    %1468 = vmatprep.subr.bf16.mxu0 %v1008
    %1469 = vmatpush1.bf16.msra.mxu0 %v1007
    %1470 = vmatprep.subr.bf16.mxu0 %v1010
    %1471 = vmatpush1.bf16.msra.mxu0 %v1009
    %1472 = vmatprep.subr.bf16.mxu0 %v1012
    %1473 = vmatpush1.bf16.msra.mxu0 %v1011
    %1474 = vmatprep.subr.bf16.mxu0 %v1014
    %1475 = vmatpush1.bf16.msra.mxu0 %v1013
    %1476 = vmatprep.subr.bf16.mxu0 %v1016
    %1477 = vmatpush1.bf16.msra.mxu0 %v1015
    %1478 = vmatprep.subr.bf16.mxu0 %v1018
    %1479 = vmatpush1.bf16.msra.mxu0 %v1017
    %1480 = vmatprep.subr.bf16.mxu0 %v1020
    %1481 = vmatpush1.bf16.msra.mxu0 %v1019
    %1482 = vmatprep.subr.bf16.mxu0 %v1022
    %1483 = vmatpush1.bf16.msra.mxu0 %v1021
    %1484 = vmatprep.subr.bf16.mxu0 %v1024
    %1485 = vmatpush1.bf16.msra.mxu0 %v1023
    %1486 = vmatprep.mubr.bf16.mxu0 %v1453
    %1487 = vmatmul.mubr.bf16.gmra.mrb[0].mxu0 %v1452
    %v1488 = vpop.f32.mrb[0].mxu0
    %v1489 = vadd.f32 0.0, %v1488
    %v1490 = vpop.f32.mrb[0].mxu0
    %v1491 = vadd.f32 0.0, %v1490
    %v1492 = vpop.f32.mrb[0].mxu0
    %v1493 = vadd.f32 0.0, %v1492
    %v1494 = vpop.f32.mrb[0].mxu0
    %v1495 = vadd.f32 0.0, %v1494
    %1496 = vdwg.mxu0
    %v1497 = vsub.f32 %v1444, %v1489
    %v1498 = vsub.f32 %v1446, %v1491
    %v1499 = vsub.f32 %v1448, %v1493
    %v1500 = vsub.f32 %v1450, %v1495
    %v1501 = vmul.f32 %v1497, %v1497
    %v1502 = vmul.f32 %v1498, %v1498
    %v1503 = vmul.f32 %v1499, %v1499
    %v1504 = vmul.f32 %v1500, %v1500
    %v1505 = vpack.c.bf16 %v1503, %v1501
    %v1506 = vpack.c.bf16 %v1504, %v1502
    %1507 = vmatprep.subr.bf16.mxu0 %v994
    %1508 = vmatpush1.bf16.msra.mxu0 %v993
    %1509 = vmatprep.subr.bf16.mxu0 %v996
    %1510 = vmatpush1.bf16.msra.mxu0 %v995
    %1511 = vmatprep.subr.bf16.mxu0 %v998
    %1512 = vmatpush1.bf16.msra.mxu0 %v997
    %1513 = vmatprep.subr.bf16.mxu0 %v1000
    %1514 = vmatpush1.bf16.msra.mxu0 %v999
    %1515 = vmatprep.subr.bf16.mxu0 %v1002
    %1516 = vmatpush1.bf16.msra.mxu0 %v1001
    %1517 = vmatprep.subr.bf16.mxu0 %v1004
    %1518 = vmatpush1.bf16.msra.mxu0 %v1003
    %1519 = vmatprep.subr.bf16.mxu0 %v1006
    %1520 = vmatpush1.bf16.msra.mxu0 %v1005
    %1521 = vmatprep.subr.bf16.mxu0 %v1008
    %1522 = vmatpush1.bf16.msra.mxu0 %v1007
    %1523 = vmatprep.subr.bf16.mxu0 %v1010
    %1524 = vmatpush1.bf16.msra.mxu0 %v1009
    %1525 = vmatprep.subr.bf16.mxu0 %v1012
    %1526 = vmatpush1.bf16.msra.mxu0 %v1011
    %1527 = vmatprep.subr.bf16.mxu0 %v1014
    %1528 = vmatpush1.bf16.msra.mxu0 %v1013
    %1529 = vmatprep.subr.bf16.mxu0 %v1016
    %1530 = vmatpush1.bf16.msra.mxu0 %v1015
    %1531 = vmatprep.subr.bf16.mxu0 %v1018
    %1532 = vmatpush1.bf16.msra.mxu0 %v1017
    %1533 = vmatprep.subr.bf16.mxu0 %v1020
    %1534 = vmatpush1.bf16.msra.mxu0 %v1019
    %1535 = vmatprep.subr.bf16.mxu0 %v1022
    %1536 = vmatpush1.bf16.msra.mxu0 %v1021
    %1537 = vmatprep.subr.bf16.mxu0 %v1024
    %1538 = vmatpush1.bf16.msra.mxu0 %v1023
    %1539 = vmatprep.mubr.bf16.mxu0 %v1506
    %1540 = vmatmul.mubr.bf16.gmra.mrb[0].mxu0 %v1505
    %v1541 = vpop.f32.mrb[0].mxu0
    %v1542 = vadd.f32 1e-05, %v1541
    %v1543 = vpop.f32.mrb[0].mxu0
    %v1544 = vadd.f32 1e-05, %v1543
    %v1545 = vpop.f32.mrb[0].mxu0
    %v1546 = vadd.f32 1e-05, %v1545
    %v1547 = vpop.f32.mrb[0].mxu0
    %v1548 = vadd.f32 1e-05, %v1547
    %1549 = vdwg.mxu0
    %v1550 = vrsqrt.pop %v1542
    %v1551 = vrsqrt.pop %v1544
    %v1552 = vrsqrt.pop %v1546
    %v1553 = vrsqrt.pop %v1548
    %v1554 = vmul.f32 %v1497, %v1550
    %v1555 = vmul.f32 %v1498, %v1551
    %v1556 = vmul.f32 %v1499, %v1552
    %v1557 = vmul.f32 %v1500, %v1553
    %s1558 = scalar_lea.vmem %s12, 1
    %v1559 = vld [vmem:[%s1558] ss:$4 sm:$0x3]
    %v1561 = vlaneseq
    %v1562 = vshrl.u32 %v1561, 7
    %v1563 = vsub.s32 0, %v1562
    %v1564 = vrot.slane %v1559, %v1563
    %v1565 = vlaneseq
    %v1566 = vshrl.u32 %v1565, 7
    %v1567 = vsub.s32 1, %v1566
    %v1568 = vrot.slane %v1559, %v1567
    %v1571 = vmul.f32 %v1554, %v1564
    %v1572 = vmul.f32 %v1555, %v1568
    %v1573 = vmul.f32 %v1556, %v1564
    %v1574 = vmul.f32 %v1557, %v1568
    %s1575 = scalar_lea.vmem %s13, 1
    %v1576 = vld [vmem:[%s1575] ss:$4 sm:$0x3]
    %v1578 = vlaneseq
    %v1579 = vshrl.u32 %v1578, 7
    %v1580 = vsub.s32 0, %v1579
    %v1581 = vrot.slane %v1576, %v1580
    %v1582 = vlaneseq
    %v1583 = vshrl.u32 %v1582, 7
    %v1584 = vsub.s32 1, %v1583
    %v1585 = vrot.slane %v1576, %v1584
    %v1588 = vadd.f32 %v1571, %v1581
    %v1589 = vadd.f32 %v1572, %v1585
    %v1590 = vadd.f32 %v1573, %v1581
    %v1591 = vadd.f32 %v1574, %v1585
    %v1592 = vmax.f32 %v1588, 0.0
    %v1593 = vmax.f32 %v1589, 0.0
    %v1594 = vmax.f32 %v1590, 0.0
    %v1595 = vmax.f32 %v1591, 0.0
    %v1596 = vadd.f32 %v1197, %v1592
    %v1597 = vadd.f32 %v1198, %v1593
    %v1598 = vadd.f32 %v1199, %v1594
    %v1599 = vadd.f32 %v1200, %v1595
    %v1600 = vpack.c.bf16 %v1598, %v1596
    %v1601 = vpack.c.bf16 %v1599, %v1597
    %s1602 = scalar_lea.vmem [#allocation6], 512
    %v1603 = vld [vmem:[%s1602] sm:$0xff]
    %v1604 = vld [vmem:[%s1602 + $0x8] sm:$0xff]
    %v1605 = vld [vmem:[%s1602 + $0x10] sm:$0xff]
    %v1606 = vld [vmem:[%s1602 + $0x18] sm:$0xff]
    %v1607 = vld [vmem:[%s1602 + $0x20] sm:$0xff]
    %v1608 = vld [vmem:[%s1602 + $0x28] sm:$0xff]
    %v1609 = vld [vmem:[%s1602 + $0x30] sm:$0xff]
    %v1610 = vld [vmem:[%s1602 + $0x38] sm:$0xff]
    %v1611 = vld [vmem:[%s1602 + $0x40] sm:$0xff]
    %v1612 = vld [vmem:[%s1602 + $0x48] sm:$0xff]
    %v1613 = vld [vmem:[%s1602 + $0x50] sm:$0xff]
    %v1614 = vld [vmem:[%s1602 + $0x58] sm:$0xff]
    %v1615 = vld [vmem:[%s1602 + $0x60] sm:$0xff]
    %v1616 = vld [vmem:[%s1602 + $0x68] sm:$0xff]
    %v1617 = vld [vmem:[%s1602 + $0x70] sm:$0xff]
    %v1618 = vld [vmem:[%s1602 + $0x78] sm:$0xff]
    %v1619 = vld [vmem:[%s1602 + $0x80] sm:$0xff]
    %v1620 = vld [vmem:[%s1602 + $0x88] sm:$0xff]
    %v1621 = vld [vmem:[%s1602 + $0x90] sm:$0xff]
    %v1622 = vld [vmem:[%s1602 + $0x98] sm:$0xff]
    %v1623 = vld [vmem:[%s1602 + $0xa0] sm:$0xff]
    %v1624 = vld [vmem:[%s1602 + $0xa8] sm:$0xff]
    %v1625 = vld [vmem:[%s1602 + $0xb0] sm:$0xff]
    %v1626 = vld [vmem:[%s1602 + $0xb8] sm:$0xff]
    %v1627 = vld [vmem:[%s1602 + $0xc0] sm:$0xff]
    %v1628 = vld [vmem:[%s1602 + $0xc8] sm:$0xff]
    %v1629 = vld [vmem:[%s1602 + $0xd0] sm:$0xff]
    %v1630 = vld [vmem:[%s1602 + $0xd8] sm:$0xff]
    %v1631 = vld [vmem:[%s1602 + $0xe0] sm:$0xff]
    %v1632 = vld [vmem:[%s1602 + $0xe8] sm:$0xff]
    %v1633 = vld [vmem:[%s1602 + $0xf0] sm:$0xff]
    %v1634 = vld [vmem:[%s1602 + $0xf8] sm:$0xff]
    %s1635 = scalar_lea.vmem %s11, 2
    %v1636 = vld [vmem:[%s1635] ss:$4 sm:$0x3]
    %v1638 = vlaneseq
    %v1639 = vshrl.u32 %v1638, 7
    %v1640 = vsub.s32 0, %v1639
    %v1641 = vrot.slane %v1636, %v1640
    %v1642 = vlaneseq
    %v1643 = vshrl.u32 %v1642, 7
    %v1644 = vsub.s32 1, %v1643
    %v1645 = vrot.slane %v1636, %v1644
    %v1680 = vunpack.c.l.b16 %v1603
    %v1681 = vunpack.c.h.b16 %v1603
    %v1682 = vunpack.c.l.b16 %v1604
    %v1683 = vunpack.c.h.b16 %v1604
    %v1684 = vunpack.c.l.b16 %v1605
    %v1685 = vunpack.c.h.b16 %v1605
    %v1686 = vunpack.c.l.b16 %v1606
    %v1687 = vunpack.c.h.b16 %v1606
    %v1688 = vunpack.c.l.b16 %v1607
    %v1689 = vunpack.c.h.b16 %v1607
    %v1690 = vunpack.c.l.b16 %v1608
    %v1691 = vunpack.c.h.b16 %v1608
    %v1692 = vunpack.c.l.b16 %v1609
    %v1693 = vunpack.c.h.b16 %v1609
    %v1694 = vunpack.c.l.b16 %v1610
    %v1695 = vunpack.c.h.b16 %v1610
    %v1696 = vunpack.c.l.b16 %v1611
    %v1697 = vunpack.c.h.b16 %v1611
    %v1698 = vunpack.c.l.b16 %v1612
    %v1699 = vunpack.c.h.b16 %v1612
    %v1700 = vunpack.c.l.b16 %v1613
    %v1701 = vunpack.c.h.b16 %v1613
    %v1702 = vunpack.c.l.b16 %v1614
    %v1703 = vunpack.c.h.b16 %v1614
    %v1704 = vunpack.c.l.b16 %v1615
    %v1705 = vunpack.c.h.b16 %v1615
    %v1706 = vunpack.c.l.b16 %v1616
    %v1707 = vunpack.c.h.b16 %v1616
    %v1708 = vunpack.c.l.b16 %v1617
    %v1709 = vunpack.c.h.b16 %v1617
    %v1710 = vunpack.c.l.b16 %v1618
    %v1711 = vunpack.c.h.b16 %v1618
    %v1712 = vunpack.c.l.b16 %v1619
    %v1713 = vunpack.c.h.b16 %v1619
    %v1714 = vunpack.c.l.b16 %v1620
    %v1715 = vunpack.c.h.b16 %v1620
    %v1716 = vunpack.c.l.b16 %v1621
    %v1717 = vunpack.c.h.b16 %v1621
    %v1718 = vunpack.c.l.b16 %v1622
    %v1719 = vunpack.c.h.b16 %v1622
    %v1720 = vunpack.c.l.b16 %v1623
    %v1721 = vunpack.c.h.b16 %v1623
    %v1722 = vunpack.c.l.b16 %v1624
    %v1723 = vunpack.c.h.b16 %v1624
    %v1724 = vunpack.c.l.b16 %v1625
    %v1725 = vunpack.c.h.b16 %v1625
    %v1726 = vunpack.c.l.b16 %v1626
    %v1727 = vunpack.c.h.b16 %v1626
    %v1728 = vunpack.c.l.b16 %v1627
    %v1729 = vunpack.c.h.b16 %v1627
    %v1730 = vunpack.c.l.b16 %v1628
    %v1731 = vunpack.c.h.b16 %v1628
    %v1732 = vunpack.c.l.b16 %v1629
    %v1733 = vunpack.c.h.b16 %v1629
    %v1734 = vunpack.c.l.b16 %v1630
    %v1735 = vunpack.c.h.b16 %v1630
    %v1736 = vunpack.c.l.b16 %v1631
    %v1737 = vunpack.c.h.b16 %v1631
    %v1738 = vunpack.c.l.b16 %v1632
    %v1739 = vunpack.c.h.b16 %v1632
    %v1740 = vunpack.c.l.b16 %v1633
    %v1741 = vunpack.c.h.b16 %v1633
    %v1742 = vunpack.c.l.b16 %v1634
    %v1743 = vunpack.c.h.b16 %v1634
    %v1744 = vpack.c.b16 %v1682, %v1680
    %v1745 = vpack.c.b16 %v1683, %v1681
    %v1746 = vpack.c.b16 %v1686, %v1684
    %v1747 = vpack.c.b16 %v1687, %v1685
    %v1748 = vpack.c.b16 %v1690, %v1688
    %v1749 = vpack.c.b16 %v1691, %v1689
    %v1750 = vpack.c.b16 %v1694, %v1692
    %v1751 = vpack.c.b16 %v1695, %v1693
    %v1752 = vpack.c.b16 %v1698, %v1696
    %v1753 = vpack.c.b16 %v1699, %v1697
    %v1754 = vpack.c.b16 %v1702, %v1700
    %v1755 = vpack.c.b16 %v1703, %v1701
    %v1756 = vpack.c.b16 %v1706, %v1704
    %v1757 = vpack.c.b16 %v1707, %v1705
    %v1758 = vpack.c.b16 %v1710, %v1708
    %v1759 = vpack.c.b16 %v1711, %v1709
    %v1760 = vpack.c.b16 %v1714, %v1712
    %v1761 = vpack.c.b16 %v1715, %v1713
    %v1762 = vpack.c.b16 %v1718, %v1716
    %v1763 = vpack.c.b16 %v1719, %v1717
    %v1764 = vpack.c.b16 %v1722, %v1720
    %v1765 = vpack.c.b16 %v1723, %v1721
    %v1766 = vpack.c.b16 %v1726, %v1724
    %v1767 = vpack.c.b16 %v1727, %v1725
    %v1768 = vpack.c.b16 %v1730, %v1728
    %v1769 = vpack.c.b16 %v1731, %v1729
    %v1770 = vpack.c.b16 %v1734, %v1732
    %v1771 = vpack.c.b16 %v1735, %v1733
    %v1772 = vpack.c.b16 %v1738, %v1736
    %v1773 = vpack.c.b16 %v1739, %v1737
    %v1774 = vpack.c.b16 %v1742, %v1740
    %v1775 = vpack.c.b16 %v1743, %v1741
    %1808 = vmatprep.subr.bf16.mxu0 %v1745
    %1809 = vmatpush1.bf16.msra.mxu0 %v1744
    %1810 = vmatprep.subr.bf16.mxu0 %v1747
    %1811 = vmatpush1.bf16.msra.mxu0 %v1746
    %1812 = vmatprep.subr.bf16.mxu0 %v1749
    %1813 = vmatpush1.bf16.msra.mxu0 %v1748
    %1814 = vmatprep.subr.bf16.mxu0 %v1751
    %1815 = vmatpush1.bf16.msra.mxu0 %v1750
    %1816 = vmatprep.subr.bf16.mxu0 %v1753
    %1817 = vmatpush1.bf16.msra.mxu0 %v1752
    %1818 = vmatprep.subr.bf16.mxu0 %v1755
    %1819 = vmatpush1.bf16.msra.mxu0 %v1754
    %1820 = vmatprep.subr.bf16.mxu0 %v1757
    %1821 = vmatpush1.bf16.msra.mxu0 %v1756
    %1822 = vmatprep.subr.bf16.mxu0 %v1759
    %1823 = vmatpush1.bf16.msra.mxu0 %v1758
    %1824 = vmatprep.subr.bf16.mxu0 %v1761
    %1825 = vmatpush1.bf16.msra.mxu0 %v1760
    %1826 = vmatprep.subr.bf16.mxu0 %v1763
    %1827 = vmatpush1.bf16.msra.mxu0 %v1762
    %1828 = vmatprep.subr.bf16.mxu0 %v1765
    %1829 = vmatpush1.bf16.msra.mxu0 %v1764
    %1830 = vmatprep.subr.bf16.mxu0 %v1767
    %1831 = vmatpush1.bf16.msra.mxu0 %v1766
    %1832 = vmatprep.subr.bf16.mxu0 %v1769
    %1833 = vmatpush1.bf16.msra.mxu0 %v1768
    %1834 = vmatprep.subr.bf16.mxu0 %v1771
    %1835 = vmatpush1.bf16.msra.mxu0 %v1770
    %1836 = vmatprep.subr.bf16.mxu0 %v1773
    %1837 = vmatpush1.bf16.msra.mxu0 %v1772
    %1838 = vmatprep.subr.bf16.mxu0 %v1775
    %1839 = vmatpush1.bf16.msra.mxu0 %v1774
    %1840 = vmatprep.mubr.bf16.mxu0 %v1601
    %1841 = vmatmul.mubr.bf16.gmra.mrb[0].mxu0 %v1600
    %v1842 = vpop.f32.mrb[0].mxu0
    %v1843 = vadd.f32 %v1641, %v1842
    %v1844 = vpop.f32.mrb[0].mxu0
    %v1845 = vadd.f32 %v1645, %v1844
    %v1846 = vpop.f32.mrb[0].mxu0
    %v1847 = vadd.f32 %v1641, %v1846
    %v1848 = vpop.f32.mrb[0].mxu0
    %v1849 = vadd.f32 %v1645, %v1848
    %1850 = vdwg.mxu0
    %v1851 = vpack.c.bf16 %v1847, %v1843
    %v1852 = vpack.c.bf16 %v1849, %v1845
    %1853 = vmatprep.subr.bf16.mxu0 %v994
    %1854 = vmatpush1.bf16.msra.mxu0 %v993
    %1855 = vmatprep.subr.bf16.mxu0 %v996
    %1856 = vmatpush1.bf16.msra.mxu0 %v995
    %1857 = vmatprep.subr.bf16.mxu0 %v998
    %1858 = vmatpush1.bf16.msra.mxu0 %v997
    %1859 = vmatprep.subr.bf16.mxu0 %v1000
    %1860 = vmatpush1.bf16.msra.mxu0 %v999
    %1861 = vmatprep.subr.bf16.mxu0 %v1002
    %1862 = vmatpush1.bf16.msra.mxu0 %v1001
    %1863 = vmatprep.subr.bf16.mxu0 %v1004
    %1864 = vmatpush1.bf16.msra.mxu0 %v1003
    %1865 = vmatprep.subr.bf16.mxu0 %v1006
    %1866 = vmatpush1.bf16.msra.mxu0 %v1005
    %1867 = vmatprep.subr.bf16.mxu0 %v1008
    %1868 = vmatpush1.bf16.msra.mxu0 %v1007
    %1869 = vmatprep.subr.bf16.mxu0 %v1010
    %1870 = vmatpush1.bf16.msra.mxu0 %v1009
    %1871 = vmatprep.subr.bf16.mxu0 %v1012
    %1872 = vmatpush1.bf16.msra.mxu0 %v1011
    %1873 = vmatprep.subr.bf16.mxu0 %v1014
    %1874 = vmatpush1.bf16.msra.mxu0 %v1013
    %1875 = vmatprep.subr.bf16.mxu0 %v1016
    %1876 = vmatpush1.bf16.msra.mxu0 %v1015
    %1877 = vmatprep.subr.bf16.mxu0 %v1018
    %1878 = vmatpush1.bf16.msra.mxu0 %v1017
    %1879 = vmatprep.subr.bf16.mxu0 %v1020
    %1880 = vmatpush1.bf16.msra.mxu0 %v1019
    %1881 = vmatprep.subr.bf16.mxu0 %v1022
    %1882 = vmatpush1.bf16.msra.mxu0 %v1021
    %1883 = vmatprep.subr.bf16.mxu0 %v1024
    %1884 = vmatpush1.bf16.msra.mxu0 %v1023
    %1885 = vmatprep.mubr.bf16.mxu0 %v1852
    %1886 = vmatmul.mubr.bf16.gmra.mrb[0].mxu0 %v1851
    %v1887 = vpop.f32.mrb[0].mxu0
    %v1888 = vadd.f32 0.0, %v1887
    %v1889 = vpop.f32.mrb[0].mxu0
    %v1890 = vadd.f32 0.0, %v1889
    %v1891 = vpop.f32.mrb[0].mxu0
    %v1892 = vadd.f32 0.0, %v1891
    %v1893 = vpop.f32.mrb[0].mxu0
    %v1894 = vadd.f32 0.0, %v1893
    %1895 = vdwg.mxu0
    %v1896 = vsub.f32 %v1843, %v1888
    %v1897 = vsub.f32 %v1845, %v1890
    %v1898 = vsub.f32 %v1847, %v1892
    %v1899 = vsub.f32 %v1849, %v1894
    %v1900 = vmul.f32 %v1896, %v1896
    %v1901 = vmul.f32 %v1897, %v1897
    %v1902 = vmul.f32 %v1898, %v1898
    %v1903 = vmul.f32 %v1899, %v1899
    %v1904 = vpack.c.bf16 %v1902, %v1900
    %v1905 = vpack.c.bf16 %v1903, %v1901
    %1906 = vmatprep.subr.bf16.mxu0 %v994
    %1907 = vmatpush1.bf16.msra.mxu0 %v993
    %1908 = vmatprep.subr.bf16.mxu0 %v996
    %1909 = vmatpush1.bf16.msra.mxu0 %v995
    %1910 = vmatprep.subr.bf16.mxu0 %v998
    %1911 = vmatpush1.bf16.msra.mxu0 %v997
    %1912 = vmatprep.subr.bf16.mxu0 %v1000
    %1913 = vmatpush1.bf16.msra.mxu0 %v999
    %1914 = vmatprep.subr.bf16.mxu0 %v1002
    %1915 = vmatpush1.bf16.msra.mxu0 %v1001
    %1916 = vmatprep.subr.bf16.mxu0 %v1004
    %1917 = vmatpush1.bf16.msra.mxu0 %v1003
    %1918 = vmatprep.subr.bf16.mxu0 %v1006
    %1919 = vmatpush1.bf16.msra.mxu0 %v1005
    %1920 = vmatprep.subr.bf16.mxu0 %v1008
    %1921 = vmatpush1.bf16.msra.mxu0 %v1007
    %1922 = vmatprep.subr.bf16.mxu0 %v1010
    %1923 = vmatpush1.bf16.msra.mxu0 %v1009
    %1924 = vmatprep.subr.bf16.mxu0 %v1012
    %1925 = vmatpush1.bf16.msra.mxu0 %v1011
    %1926 = vmatprep.subr.bf16.mxu0 %v1014
    %1927 = vmatpush1.bf16.msra.mxu0 %v1013
    %1928 = vmatprep.subr.bf16.mxu0 %v1016
    %1929 = vmatpush1.bf16.msra.mxu0 %v1015
    %1930 = vmatprep.subr.bf16.mxu0 %v1018
    %1931 = vmatpush1.bf16.msra.mxu0 %v1017
    %1932 = vmatprep.subr.bf16.mxu0 %v1020
    %1933 = vmatpush1.bf16.msra.mxu0 %v1019
    %1934 = vmatprep.subr.bf16.mxu0 %v1022
    %1935 = vmatpush1.bf16.msra.mxu0 %v1021
    %1936 = vmatprep.subr.bf16.mxu0 %v1024
    %1937 = vmatpush1.bf16.msra.mxu0 %v1023
    %1938 = vmatprep.mubr.bf16.mxu0 %v1905
    %1939 = vmatmul.mubr.bf16.gmra.mrb[0].mxu0 %v1904
    %v1940 = vpop.f32.mrb[0].mxu0
    %v1941 = vadd.f32 1e-05, %v1940
    %v1942 = vpop.f32.mrb[0].mxu0
    %v1943 = vadd.f32 1e-05, %v1942
    %v1944 = vpop.f32.mrb[0].mxu0
    %v1945 = vadd.f32 1e-05, %v1944
    %v1946 = vpop.f32.mrb[0].mxu0
    %v1947 = vadd.f32 1e-05, %v1946
    %1948 = vdwg.mxu0
    %v1949 = vrsqrt.pop %v1941
    %v1950 = vrsqrt.pop %v1943
    %v1951 = vrsqrt.pop %v1945
    %v1952 = vrsqrt.pop %v1947
    %v1953 = vmul.f32 %v1896, %v1949
    %v1954 = vmul.f32 %v1897, %v1950
    %v1955 = vmul.f32 %v1898, %v1951
    %v1956 = vmul.f32 %v1899, %v1952
    %s1957 = scalar_lea.vmem %s12, 2
    %v1958 = vld [vmem:[%s1957] ss:$4 sm:$0x3]
    %v1960 = vlaneseq
    %v1961 = vshrl.u32 %v1960, 7
    %v1962 = vsub.s32 0, %v1961
    %v1963 = vrot.slane %v1958, %v1962
    %v1964 = vlaneseq
    %v1965 = vshrl.u32 %v1964, 7
    %v1966 = vsub.s32 1, %v1965
    %v1967 = vrot.slane %v1958, %v1966
    %v1970 = vmul.f32 %v1953, %v1963
    %v1971 = vmul.f32 %v1954, %v1967
    %v1972 = vmul.f32 %v1955, %v1963
    %v1973 = vmul.f32 %v1956, %v1967
    %s1974 = scalar_lea.vmem %s13, 2
    %v1975 = vld [vmem:[%s1974] ss:$4 sm:$0x3]
    %v1977 = vlaneseq
    %v1978 = vshrl.u32 %v1977, 7
    %v1979 = vsub.s32 0, %v1978
    %v1980 = vrot.slane %v1975, %v1979
    %v1981 = vlaneseq
    %v1982 = vshrl.u32 %v1981, 7
    %v1983 = vsub.s32 1, %v1982
    %v1984 = vrot.slane %v1975, %v1983
    %v1987 = vadd.f32 %v1970, %v1980
    %v1988 = vadd.f32 %v1971, %v1984
    %v1989 = vadd.f32 %v1972, %v1980
    %v1990 = vadd.f32 %v1973, %v1984
    %v1991 = vmax.f32 %v1987, 0.0
    %v1992 = vmax.f32 %v1988, 0.0
    %v1993 = vmax.f32 %v1989, 0.0
    %v1994 = vmax.f32 %v1990, 0.0
    %v1995 = vadd.f32 %v1596, %v1991
    %v1996 = vadd.f32 %v1597, %v1992
    %v1997 = vadd.f32 %v1598, %v1993
    %v1998 = vadd.f32 %v1599, %v1994
    %v1999 = vpack.c.bf16 %v1997, %v1995
    %v2000 = vpack.c.bf16 %v1998, %v1996
    %2001 = vmatprep.subr.bf16.mxu0 %v994
    %2002 = vmatpush1.bf16.msra.mxu0 %v993
    %2003 = vmatprep.subr.bf16.mxu0 %v996
    %2004 = vmatpush1.bf16.msra.mxu0 %v995
    %2005 = vmatprep.subr.bf16.mxu0 %v998
    %2006 = vmatpush1.bf16.msra.mxu0 %v997
    %2007 = vmatprep.subr.bf16.mxu0 %v1000
    %2008 = vmatpush1.bf16.msra.mxu0 %v999
    %2009 = vmatprep.subr.bf16.mxu0 %v1002
    %2010 = vmatpush1.bf16.msra.mxu0 %v1001
    %2011 = vmatprep.subr.bf16.mxu0 %v1004
    %2012 = vmatpush1.bf16.msra.mxu0 %v1003
    %2013 = vmatprep.subr.bf16.mxu0 %v1006
    %2014 = vmatpush1.bf16.msra.mxu0 %v1005
    %2015 = vmatprep.subr.bf16.mxu0 %v1008
    %2016 = vmatpush1.bf16.msra.mxu0 %v1007
    %2017 = vmatprep.subr.bf16.mxu0 %v1010
    %2018 = vmatpush1.bf16.msra.mxu0 %v1009
    %2019 = vmatprep.subr.bf16.mxu0 %v1012
    %2020 = vmatpush1.bf16.msra.mxu0 %v1011
    %2021 = vmatprep.subr.bf16.mxu0 %v1014
    %2022 = vmatpush1.bf16.msra.mxu0 %v1013
    %2023 = vmatprep.subr.bf16.mxu0 %v1016
    %2024 = vmatpush1.bf16.msra.mxu0 %v1015
    %2025 = vmatprep.subr.bf16.mxu0 %v1018
    %2026 = vmatpush1.bf16.msra.mxu0 %v1017
    %2027 = vmatprep.subr.bf16.mxu0 %v1020
    %2028 = vmatpush1.bf16.msra.mxu0 %v1019
    %2029 = vmatprep.subr.bf16.mxu0 %v1022
    %2030 = vmatpush1.bf16.msra.mxu0 %v1021
    %2031 = vmatprep.subr.bf16.mxu0 %v1024
    %2032 = vmatpush1.bf16.msra.mxu0 %v1023
    %2033 = vmatprep.mubr.bf16.mxu0 %v2000
    %2034 = vmatmul.mubr.bf16.gmra.mrb[0].mxu0 %v1999
    %v2035 = vpop.f32.mrb[0].mxu0
    %v2036 = vadd.f32 0.0, %v2035
    %v2037 = vpop.f32.mrb[0].mxu0
    %v2038 = vadd.f32 0.0, %v2037
    %v2039 = vpop.f32.mrb[0].mxu0
    %v2040 = vadd.f32 0.0, %v2039
    %v2041 = vpop.f32.mrb[0].mxu0
    %v2042 = vadd.f32 0.0, %v2041
    %2043 = vdwg.mxu0
    %v2044 = vsub.f32 %v1995, %v2036
    %v2045 = vsub.f32 %v1996, %v2038
    %v2046 = vsub.f32 %v1997, %v2040
    %v2047 = vsub.f32 %v1998, %v2042
    %v2048 = vmul.f32 %v2044, %v2044
    %v2049 = vmul.f32 %v2045, %v2045
    %v2050 = vmul.f32 %v2046, %v2046
    %v2051 = vmul.f32 %v2047, %v2047
    %v2052 = vpack.c.bf16 %v2050, %v2048
    %v2053 = vpack.c.bf16 %v2051, %v2049
    %2054 = vmatprep.subr.bf16.mxu0 %v994
    %2055 = vmatpush1.bf16.msra.mxu0 %v993
    %2056 = vmatprep.subr.bf16.mxu0 %v996
    %2057 = vmatpush1.bf16.msra.mxu0 %v995
    %2058 = vmatprep.subr.bf16.mxu0 %v998
    %2059 = vmatpush1.bf16.msra.mxu0 %v997
    %2060 = vmatprep.subr.bf16.mxu0 %v1000
    %2061 = vmatpush1.bf16.msra.mxu0 %v999
    %2062 = vmatprep.subr.bf16.mxu0 %v1002
    %2063 = vmatpush1.bf16.msra.mxu0 %v1001
    %2064 = vmatprep.subr.bf16.mxu0 %v1004
    %2065 = vmatpush1.bf16.msra.mxu0 %v1003
    %2066 = vmatprep.subr.bf16.mxu0 %v1006
    %2067 = vmatpush1.bf16.msra.mxu0 %v1005
    %2068 = vmatprep.subr.bf16.mxu0 %v1008
    %2069 = vmatpush1.bf16.msra.mxu0 %v1007
    %2070 = vmatprep.subr.bf16.mxu0 %v1010
    %2071 = vmatpush1.bf16.msra.mxu0 %v1009
    %2072 = vmatprep.subr.bf16.mxu0 %v1012
    %2073 = vmatpush1.bf16.msra.mxu0 %v1011
    %2074 = vmatprep.subr.bf16.mxu0 %v1014
    %2075 = vmatpush1.bf16.msra.mxu0 %v1013
    %2076 = vmatprep.subr.bf16.mxu0 %v1016
    %2077 = vmatpush1.bf16.msra.mxu0 %v1015
    %2078 = vmatprep.subr.bf16.mxu0 %v1018
    %2079 = vmatpush1.bf16.msra.mxu0 %v1017
    %2080 = vmatprep.subr.bf16.mxu0 %v1020
    %2081 = vmatpush1.bf16.msra.mxu0 %v1019
    %2082 = vmatprep.subr.bf16.mxu0 %v1022
    %2083 = vmatpush1.bf16.msra.mxu0 %v1021
    %2084 = vmatprep.subr.bf16.mxu0 %v1024
    %2085 = vmatpush1.bf16.msra.mxu0 %v1023
    %2086 = vmatprep.mubr.bf16.mxu0 %v2053
    %2087 = vmatmul.mubr.bf16.gmra.mrb[0].mxu0 %v2052
    %v2088 = vpop.f32.mrb[0].mxu0
    %v2089 = vadd.f32 1e-05, %v2088
    %v2090 = vpop.f32.mrb[0].mxu0
    %v2091 = vadd.f32 1e-05, %v2090
    %v2092 = vpop.f32.mrb[0].mxu0
    %v2093 = vadd.f32 1e-05, %v2092
    %v2094 = vpop.f32.mrb[0].mxu0
    %v2095 = vadd.f32 1e-05, %v2094
    %2096 = vdwg.mxu0
    %v2097 = vrsqrt.pop %v2089
    %v2098 = vrsqrt.pop %v2091
    %v2099 = vrsqrt.pop %v2093
    %v2100 = vrsqrt.pop %v2095
    %v2101 = vmul.f32 %v2044, %v2097
    %v2102 = vmul.f32 %v2045, %v2098
    %v2103 = vmul.f32 %v2046, %v2099
    %v2104 = vmul.f32 %v2047, %v2100
    %v2105 = vpack.c.bf16 %v2103, %v2101
    %v2106 = vpack.c.bf16 %v2104, %v2102
    %v2107 = vld [vmem:[#allocation7] sm:$0xf]
    %v2108 = vld [vmem:[#allocation7 + $0x4] sm:$0xf]
    %v2109 = vld [vmem:[#allocation7 + $0x8] sm:$0xf]
    %v2110 = vld [vmem:[#allocation7 + $0xc] sm:$0xf]
    %v2111 = vld [vmem:[#allocation7 + $0x10] sm:$0xf]
    %v2112 = vld [vmem:[#allocation7 + $0x14] sm:$0xf]
    %v2113 = vld [vmem:[#allocation7 + $0x18] sm:$0xf]
    %v2114 = vld [vmem:[#allocation7 + $0x1c] sm:$0xf]
    %v2115 = vld [vmem:[#allocation7 + $0x20] sm:$0xf]
    %v2116 = vld [vmem:[#allocation7 + $0x24] sm:$0xf]
    %v2117 = vld [vmem:[#allocation7 + $0x28] sm:$0xf]
    %v2118 = vld [vmem:[#allocation7 + $0x2c] sm:$0xf]
    %v2119 = vld [vmem:[#allocation7 + $0x30] sm:$0xf]
    %v2120 = vld [vmem:[#allocation7 + $0x34] sm:$0xf]
    %v2121 = vld [vmem:[#allocation7 + $0x38] sm:$0xf]
    %v2122 = vld [vmem:[#allocation7 + $0x3c] sm:$0xf]
    %v2123 = vld [vmem:[#allocation7 + $0x40] sm:$0xf]
    %v2124 = vld [vmem:[#allocation7 + $0x44] sm:$0xf]
    %v2125 = vld [vmem:[#allocation7 + $0x48] sm:$0xf]
    %v2126 = vld [vmem:[#allocation7 + $0x4c] sm:$0xf]
    %v2127 = vld [vmem:[#allocation7 + $0x50] sm:$0xf]
    %v2128 = vld [vmem:[#allocation7 + $0x54] sm:$0xf]
    %v2129 = vld [vmem:[#allocation7 + $0x58] sm:$0xf]
    %v2130 = vld [vmem:[#allocation7 + $0x5c] sm:$0xf]
    %v2131 = vld [vmem:[#allocation7 + $0x60] sm:$0xf]
    %v2132 = vld [vmem:[#allocation7 + $0x64] sm:$0xf]
    %v2133 = vld [vmem:[#allocation7 + $0x68] sm:$0xf]
    %v2134 = vld [vmem:[#allocation7 + $0x6c] sm:$0xf]
    %v2135 = vld [vmem:[#allocation7 + $0x70] sm:$0xf]
    %v2136 = vld [vmem:[#allocation7 + $0x74] sm:$0xf]
    %v2137 = vld [vmem:[#allocation7 + $0x78] sm:$0xf]
    %v2138 = vld [vmem:[#allocation7 + $0x7c] sm:$0xf]
    %v2139 = vld [vmem:[%s16] sm:$0x1]
    %v2141 = vlaneseq
    %v2142 = vshrl.u32 %v2141, 7
    %v2143 = vsub.s32 0, %v2142
    %v2144 = vrot.slane %v2139, %v2143
    %v2178 = vunpack.c.l.b16 %v2107
    %v2179 = vunpack.c.l.b16 %v2108
    %v2180 = vunpack.c.l.b16 %v2109
    %v2181 = vunpack.c.l.b16 %v2110
    %v2182 = vunpack.c.l.b16 %v2111
    %v2183 = vunpack.c.l.b16 %v2112
    %v2184 = vunpack.c.l.b16 %v2113
    %v2185 = vunpack.c.l.b16 %v2114
    %v2186 = vunpack.c.l.b16 %v2115
    %v2187 = vunpack.c.l.b16 %v2116
    %v2188 = vunpack.c.l.b16 %v2117
    %v2189 = vunpack.c.l.b16 %v2118
    %v2190 = vunpack.c.l.b16 %v2119
    %v2191 = vunpack.c.l.b16 %v2120
    %v2192 = vunpack.c.l.b16 %v2121
    %v2193 = vunpack.c.l.b16 %v2122
    %v2194 = vunpack.c.l.b16 %v2123
    %v2195 = vunpack.c.l.b16 %v2124
    %v2196 = vunpack.c.l.b16 %v2125
    %v2197 = vunpack.c.l.b16 %v2126
    %v2198 = vunpack.c.l.b16 %v2127
    %v2199 = vunpack.c.l.b16 %v2128
    %v2200 = vunpack.c.l.b16 %v2129
    %v2201 = vunpack.c.l.b16 %v2130
    %v2202 = vunpack.c.l.b16 %v2131
    %v2203 = vunpack.c.l.b16 %v2132
    %v2204 = vunpack.c.l.b16 %v2133
    %v2205 = vunpack.c.l.b16 %v2134
    %v2206 = vunpack.c.l.b16 %v2135
    %v2207 = vunpack.c.l.b16 %v2136
    %v2208 = vunpack.c.l.b16 %v2137
    %v2209 = vunpack.c.l.b16 %v2138
    %v2210 = vpack.c.b16 %v2179, %v2178
    %v2211 = vpack.c.b16 %v2181, %v2180
    %v2212 = vpack.c.b16 %v2183, %v2182
    %v2213 = vpack.c.b16 %v2185, %v2184
    %v2214 = vpack.c.b16 %v2187, %v2186
    %v2215 = vpack.c.b16 %v2189, %v2188
    %v2216 = vpack.c.b16 %v2191, %v2190
    %v2217 = vpack.c.b16 %v2193, %v2192
    %v2218 = vpack.c.b16 %v2195, %v2194
    %v2219 = vpack.c.b16 %v2197, %v2196
    %v2220 = vpack.c.b16 %v2199, %v2198
    %v2221 = vpack.c.b16 %v2201, %v2200
    %v2222 = vpack.c.b16 %v2203, %v2202
    %v2223 = vpack.c.b16 %v2205, %v2204
    %v2224 = vpack.c.b16 %v2207, %v2206
    %v2225 = vpack.c.b16 %v2209, %v2208
    %2242 = vmatprep.subr.bf16.mxu0 0
    %2243 = vmatpush1.bf16.msra.mxu0 %v2210
    %2244 = vmatprep.subr.bf16.mxu0 0
    %2245 = vmatpush1.bf16.msra.mxu0 %v2211
    %2246 = vmatprep.subr.bf16.mxu0 0
    %2247 = vmatpush1.bf16.msra.mxu0 %v2212
    %2248 = vmatprep.subr.bf16.mxu0 0
    %2249 = vmatpush1.bf16.msra.mxu0 %v2213
    %2250 = vmatprep.subr.bf16.mxu0 0
    %2251 = vmatpush1.bf16.msra.mxu0 %v2214
    %2252 = vmatprep.subr.bf16.mxu0 0
    %2253 = vmatpush1.bf16.msra.mxu0 %v2215
    %2254 = vmatprep.subr.bf16.mxu0 0
    %2255 = vmatpush1.bf16.msra.mxu0 %v2216
    %2256 = vmatprep.subr.bf16.mxu0 0
    %2257 = vmatpush1.bf16.msra.mxu0 %v2217
    %2258 = vmatprep.subr.bf16.mxu0 0
    %2259 = vmatpush1.bf16.msra.mxu0 %v2218
    %2260 = vmatprep.subr.bf16.mxu0 0
    %2261 = vmatpush1.bf16.msra.mxu0 %v2219
    %2262 = vmatprep.subr.bf16.mxu0 0
    %2263 = vmatpush1.bf16.msra.mxu0 %v2220
    %2264 = vmatprep.subr.bf16.mxu0 0
    %2265 = vmatpush1.bf16.msra.mxu0 %v2221
    %2266 = vmatprep.subr.bf16.mxu0 0
    %2267 = vmatpush1.bf16.msra.mxu0 %v2222
    %2268 = vmatprep.subr.bf16.mxu0 0
    %2269 = vmatpush1.bf16.msra.mxu0 %v2223
    %2270 = vmatprep.subr.bf16.mxu0 0
    %2271 = vmatpush1.bf16.msra.mxu0 %v2224
    %2272 = vmatprep.subr.bf16.mxu0 0
    %2273 = vmatpush1.bf16.msra.mxu0 %v2225
    %2274 = vmatprep.mubr.bf16.mxu0 %v2106
    %2275 = vmatmul.mubr.bf16.gmra.mrb[0].mxu0 %v2105
    %v2276 = vpop.f32.mrb[0].mxu0
    %v2277 = vadd.f32 %v2144, %v2276
    %v2278 = vpop.f32.mrb[0].mxu0
    %v2279 = vpop.f32.mrb[0].mxu0
    %v2280 = vadd.f32 %v2144, %v2279
    %v2281 = vpop.f32.mrb[0].mxu0
    %2282 = vdwg.mxu0
    %2283 = vst [vmem:[%s17] sm:$0xff] %v2277
    %2284 = vst [vmem:[%s17 + $0x8] sm:$0xff] %v2280
    // Predicated region
    $region86: #{conditional_diffusion_forward.1} parent=1 // pred_check
      _
    $region87: #{conditional_diffusion_forward.1} parent=1 // pred_check_branch
      %2286 = sbr.rel (0) target = $region89
    $region88: #{conditional_diffusion_forward.1} parent=1 // pred_region
      _
    $region89: #{conditional_diffusion_forward.1} parent=1 // pred_fallthru
      _
    // Predicated region
    $region90: #{conditional_diffusion_forward.1} parent=1 // pred_check
      _
    $region91: #{conditional_diffusion_forward.1} parent=1 // pred_check_branch
      %2288 = sbr.rel (0) target = $region93
    $region92: #{conditional_diffusion_forward.1} parent=1 // pred_region
      _
    $region93: #{conditional_diffusion_forward.1} parent=1 // pred_fallthru
      _
    %2289 = vsyncpa [#allocation3], 1
    %2290 = vsyncpa [#allocation5], 1
    %2291 = vsyncpa [#allocation8], 1

</llo_original>
